<compile_context>
chip_gen: v6e
topology: v6e:2x2x1
jax: 0.10.0
libtpu: 0.0.40
codegen_flags: <defaults>
</compile_context>

<pallas_src>
import functools

import jax
import jax.numpy as jnp
import numpy as np
from jax import lax
from jax.experimental import pallas as pl
from jax.experimental.pallas import tpu as pltpu


def _pick_tile(n, max_tile):
    """Largest divisor of n that is <= max_tile (whole extent if n is prime)."""
    best = 1
    for d in range(1, min(n, max_tile) + 1):
        if n % d == 0:
            best = d
    return n if (best == 1 and n > 1) else best


# --------------------------------------------------------------------------
# Kernels
# --------------------------------------------------------------------------
def _conv1_film_kernel(xa_ref, xh1_ref, xh2_ref, w3_ref, b1_ref, sc_ref, sh_ref,
                       o_ref, *, th, w):
    """conv1(silu(x)) + bias, FiLM (scale/shift) and SiLU, fused.

    xa_ref : (1, th, W+2, Cin) bf16  main rows of the padded input
    xh1/xh2: (1, 1,  W+2, Cin) bf16  the two halo rows below the main block
    w3_ref : (3, 3*Cin, Cout) bf16   conv taps, K-concatenated per kernel row
    sc/sh  : (1, 1, Cout) f32        per-batch (1+scale) and shift (pre-computed)
    o_ref  : (1, th, W+2, Cout) bf16 activation stored with zero W-padding
    """
    cout = w3_ref.shape[-1]
    win = jnp.concatenate([xa_ref[0], xh1_ref[0], xh2_ref[0]], axis=0)  # (th+2, W+2, Cin)
    a = win.astype(jnp.float32)
    act = (a * jax.nn.sigmoid(a)).astype(jnp.bfloat16)   # fused SiLU; silu(0)=0 keeps halo valid

    acc = jnp.zeros((th * w, cout), jnp.float32)
    for dh in range(3):                                   # 3 matmuls, K = 3*Cin (deeper MXU)
        rows = act[dh:dh + th]                            # (th, W+2, Cin)
        t = jnp.concatenate([rows[:, 0:w], rows[:, 1:w + 1], rows[:, 2:w + 2]], axis=-1)
        acc = acc + jnp.dot(t.reshape(th * w, -1), w3_ref[dh],
                            preferred_element_type=jnp.float32)
    h = acc + b1_ref[...]
    hm = h * sc_ref[0] + sh_ref[0]                        # FiLM: (1+scale) folded in wrapper
    g = (hm * jax.nn.sigmoid(hm)).reshape(th, w, cout).astype(o_ref.dtype)
    zcol = jnp.zeros((th, 1, cout), o_ref.dtype)
    o_ref[0] = jnp.concatenate([zcol, g, zcol], axis=1)   # W-padded store (no wrapper pad)


def _conv2_shortcut_kernel(gt_ref, ga_ref, gb_ref, xa_ref, xh_ref,
                           w3_ref, b2_ref, ws_ref, bs_ref, o_ref, *, th, w):
    """conv2(g) + bias with fused 1x1-conv shortcut.  g stays bf16 (no upcast).

    gt/ga/gb: 1 halo row above / th main rows / 1 halo row below of g (bf16)
    xa/xh   : padded-input rows reused for the un-padded 1x1 shortcut operand
    o_ref   : (1, th, W, Cout) bf16
    """
    j = pl.program_id(1)
    nb = pl.num_programs(1)
    cout = w3_ref.shape[-1]

    top = jnp.where(j == 0, jnp.zeros_like(gt_ref[0]), gt_ref[0])        # zero above image
    bot = jnp.where(j == nb - 1, jnp.zeros_like(gb_ref[0]), gb_ref[0])   # zero below image
    win = jnp.concatenate([top, ga_ref[0], bot], axis=0)                 # (th+2, W+2, C) bf16

    # 1x1 shortcut on the un-padded rows: padded rows [j*th+1, (j+1)*th+1).
    xin = jnp.concatenate([xa_ref[0, 1:th], xh_ref[0]], axis=0)[:, 1:w + 1, :]
    acc = jnp.dot(xin.reshape(th * w, -1), ws_ref[...],
                  preferred_element_type=jnp.float32) + bs_ref[...]

    for dh in range(3):
        rows = win[dh:dh + th]
        t = jnp.concatenate([rows[:, 0:w], rows[:, 1:w + 1], rows[:, 2:w + 2]], axis=-1)
        acc = acc + jnp.dot(t.reshape(th * w, -1), w3_ref[dh],
                            preferred_element_type=jnp.float32)
    o_ref[0] = (acc + b2_ref[...]).reshape(th, w, cout).astype(o_ref.dtype)


def _attention_kernel(x_ref, wq_ref, bq_ref, wk_ref, bk_ref, wv_ref, bv_ref,
                      wo_ref, bo_ref, o_ref, q_scr, acc_scr, *, tk):
    """Self-attention, blocked over the key axis.

    The reference softmaxes over the QUERY axis (torch dim=1); queries stay
    resident, so each key block's softmax columns are exact (no online rescale)
    and the (S, S) score matrix never lives in VMEM at once.
    """
    kb = pl.program_id(1)

    @pl.when(kb == 0)
    def _():
        q = jnp.dot(x_ref[0], wq_ref[...], preferred_element_type=jnp.float32) + bq_ref[...]
        q_scr[...] = q.astype(jnp.bfloat16)               # d_k**-0.5 already folded into wq/bq
        acc_scr[...] = jnp.zeros_like(acc_scr)

    xk = x_ref[0, pl.ds(kb * tk, tk), :]                  # (tk, C) bf16
    k = (jnp.dot(xk, wk_ref[...], preferred_element_type=jnp.float32)
         + bk_ref[...]).astype(jnp.bfloat16)
    v = (jnp.dot(xk, wv_ref[...], preferred_element_type=jnp.float32)
         + bv_ref[...]).astype(jnp.bfloat16)

    s = lax.dot_general(q_scr[...], k, (((1,), (1,)), ((), ())),
                        preferred_element_type=jnp.float32)          # (S, tk)
    e = jnp.exp(s - jnp.max(s, axis=0, keepdims=True))               # softmax over queries
    p = e * pl.reciprocal(jnp.sum(e, axis=0, keepdims=True), approx=True)
    acc_scr[...] += jnp.dot(p.astype(jnp.bfloat16), v, preferred_element_type=jnp.float32)

    @pl.when(kb == pl.num_programs(1) - 1)
    def _():
        res = acc_scr[...].astype(jnp.bfloat16)
        out = jnp.dot(res, wo_ref[...], preferred_element_type=jnp.float32) + bo_ref[...]
        o_ref[0] = out + x_ref[0].astype(jnp.float32)     # residual add in f32


# --------------------------------------------------------------------------
# Pallas-call wrappers
# --------------------------------------------------------------------------
_VMEM_LIMIT = 64 * 1024 * 1024


def _conv1_film(x_pad, w3, b1, scale1, shift, *, th):
    bsz, hp, wp_, cin = x_pad.shape
    h, w = hp - 2, wp_ - 2
    nb = h // th
    c = w3.shape[-1]
    kernel = functools.partial(_conv1_film_kernel, th=th, w=w)
    return pl.pallas_call(
        kernel,
        out_shape=jax.ShapeDtypeStruct((bsz, h, w + 2, c), jnp.bfloat16),
        grid=(bsz, nb),
        in_specs=[
            pl.BlockSpec((1, th, wp_, cin), lambda i, j: (i, j, 0, 0)),
            pl.BlockSpec((1, 1, wp_, cin), lambda i, j: (i, (j + 1) * th, 0, 0)),
            pl.BlockSpec((1, 1, wp_, cin), lambda i, j: (i, (j + 1) * th + 1, 0, 0)),
            pl.BlockSpec((3, 3 * cin, c), lambda i, j: (0, 0, 0)),
            pl.BlockSpec((1, c), lambda i, j: (0, 0)),
            pl.BlockSpec((1, 1, c), lambda i, j: (i, 0, 0)),
            pl.BlockSpec((1, 1, c), lambda i, j: (i, 0, 0)),
        ],
        out_specs=pl.BlockSpec((1, th, w + 2, c), lambda i, j: (i, j, 0, 0)),
        compiler_params=pltpu.CompilerParams(
            dimension_semantics=("parallel", "parallel"),
            vmem_limit_bytes=_VMEM_LIMIT),
    )(x_pad, x_pad, x_pad, w3, b1, scale1, shift)


def _conv2_shortcut(g, x_pad, w3, b2, ws, bs, *, th):
    bsz, h, wp_, c = g.shape
    w = wp_ - 2
    nb = h // th
    cin = x_pad.shape[-1]
    kernel = functools.partial(_conv2_shortcut_kernel, th=th, w=w)
    return pl.pallas_call(
        kernel,
        out_shape=jax.ShapeDtypeStruct((bsz, h, w, c), jnp.bfloat16),
        grid=(bsz, nb),
        in_specs=[
            pl.BlockSpec((1, 1, wp_, c), lambda i, j: (i, jnp.maximum(j * th - 1, 0), 0, 0)),
            pl.BlockSpec((1, th, wp_, c), lambda i, j: (i, j, 0, 0)),
            pl.BlockSpec((1, 1, wp_, c), lambda i, j: (i, jnp.minimum((j + 1) * th, h - 1), 0, 0)),
            pl.BlockSpec((1, th, wp_, cin), lambda i, j: (i, j, 0, 0)),
            pl.BlockSpec((1, 1, wp_, cin), lambda i, j: (i, (j + 1) * th, 0, 0)),
            pl.BlockSpec((3, 3 * c, c), lambda i, j: (0, 0, 0)),
            pl.BlockSpec((1, c), lambda i, j: (0, 0)),
            pl.BlockSpec((cin, c), lambda i, j: (0, 0)),
            pl.BlockSpec((1, c), lambda i, j: (0, 0)),
        ],
        out_specs=pl.BlockSpec((1, th, w, c), lambda i, j: (i, j, 0, 0)),
        compiler_params=pltpu.CompilerParams(
            dimension_semantics=("parallel", "parallel"),
            vmem_limit_bytes=_VMEM_LIMIT),
    )(g, g, g, x_pad, x_pad, w3, b2, ws, bs)


def _attention(x_bsc, prep, *, key_block):
    bsz, s, c = x_bsc.shape
    tk = _pick_tile(s, key_block)
    n_kb = s // tk
    kernel = functools.partial(_attention_kernel, tk=tk)
    const = lambda i, j: (0, 0)
    return pl.pallas_call(
        kernel,
        out_shape=jax.ShapeDtypeStruct((bsz, s, c), jnp.float32),
        grid=(bsz, n_kb),
        in_specs=[
            pl.BlockSpec((1, s, c), lambda i, j: (i, 0, 0)),
            pl.BlockSpec((c, c), const), pl.BlockSpec((1, c), const),
            pl.BlockSpec((c, c), const), pl.BlockSpec((1, c), const),
            pl.BlockSpec((c, c), const), pl.BlockSpec((1, c), const),
            pl.BlockSpec((c, c), const), pl.BlockSpec((1, c), const),
        ],
        out_specs=pl.BlockSpec((1, s, c), lambda i, j: (i, 0, 0)),
        scratch_shapes=[pltpu.VMEM((s, c), jnp.bfloat16),
                        pltpu.VMEM((s, c), jnp.float32)],
        compiler_params=pltpu.CompilerParams(
            dimension_semantics=("parallel", "arbitrary"),
            vmem_limit_bytes=_VMEM_LIMIT),
    )(x_bsc, prep["wq"], prep["bq"], prep["wk"], prep["bk"],
      prep["wv"], prep["bv"], prep["wo"], prep["bo"])


# --------------------------------------------------------------------------
# Parameters (PyTorch layout) + one-time layout/dtype preparation
# --------------------------------------------------------------------------
def init_params(key, in_channels, out_channels, cond_channels):
    cin_tot = in_channels + out_channels
    c = out_channels
    ks = jax.random.split(key, 12)

    def normal(k, shape, fan_in):
        return jax.random.normal(k, shape, jnp.float32) / np.sqrt(fan_in)

    return {
        "w1": normal(ks[0], (c, cin_tot, 3, 3), cin_tot * 9),   # conv1 OIHW
        "b1": normal(ks[1], (c,), cin_tot * 9),
        "w2": normal(ks[2], (c, c, 3, 3), c * 9),               # conv2 OIHW
        "b2": normal(ks[3], (c,), c * 9),
        "ws": normal(ks[4], (c, cin_tot, 1, 1), cin_tot),       # shortcut 1x1 conv
        "bs": normal(ks[5], (c,), cin_tot),
        "we": normal(ks[6], (2 * c, cond_channels), cond_channels),  # cond_emb Linear
        "be": normal(ks[7], (2 * c,), cond_channels),
        "wp": normal(ks[8], (3 * c, c), c),                     # attn projection Linear
        "bp": normal(ks[9], (3 * c,), c),
        "wo": normal(ks[10], (c, c), c),                        # attn output Linear
        "bo": normal(ks[11], (c,), c),
    }


def prepare_params(p):
    """One-time conversion: OIHW conv -> (3, 3*Cin, Cout) K-concatenated taps;
    Linear (out,in) -> (in,out); matmul operands bf16 (f32 accumulation in-kernel);
    biases f32; attention qkv split with d_k**-0.5 folded into the q projection."""
    c, cin = p["w1"].shape[0], p["w1"].shape[1]
    bf = lambda a: a.astype(jnp.bfloat16)
    scale = c ** -0.5                       # AttentionBlock: d_k = n_channels
    wp_t = p["wp"].T                        # (C, 3C): q | k | v along the last axis
    return {
        "w1": bf(jnp.transpose(p["w1"], (2, 3, 1, 0)).reshape(3, 3 * cin, c)),
        "b1": p["b1"][None, :],
        "w2": bf(jnp.transpose(p["w2"], (2, 3, 1, 0)).reshape(3, 3 * c, c)),
        "b2": p["b2"][None, :],
        "ws": bf(p["ws"][:, :, 0, 0].T),
        "bs": p["bs"][None, :],
        "we": p["we"].T,                    # FiLM Linear runs once in the wrapper (tiny)
        "be": p["be"],
        "wq": bf(wp_t[:, :c] * scale), "bq": (p["bp"][:c] * scale)[None, :],
        "wk": bf(wp_t[:, c:2 * c]),    "bk": p["bp"][c:2 * c][None, :],
        "wv": bf(wp_t[:, 2 * c:]),     "bv": p["bp"][2 * c:][None, :],
        "wo": bf(p["wo"].T),           "bo": p["bo"][None, :],
    }


# --------------------------------------------------------------------------
# UpBlock forward
# --------------------------------------------------------------------------
def upblock_forward(x_nchw, emb, prep, has_attn=True, row_block=16, key_block=1024):
    bsz, _, h, w = x_nchw.shape
    c = prep["w1"].shape[-1]
    th = _pick_tile(h, row_block)           # largest divisor of H <= row_block

    # NHWC relayout + zero pad + bf16 cast fused into one wrapper op: this single
    # padded bf16 copy is the only HBM staging of the input (no window stacks).
    x_pad = jnp.pad(jnp.transpose(x_nchw, (0, 2, 3, 1)),
                    ((0, 0), (1, 1), (1, 1), (0, 0))).astype(jnp.bfloat16)

    # FiLM Linear hoisted out of the conv kernel; (1+scale) pre-folded.
    eo = emb.astype(jnp.float32) @ prep["we"] + prep["be"]
    scale1 = (1.0 + eo[:, :c]).reshape(bsz, 1, c)
    shift = eo[:, c:].reshape(bsz, 1, c)

    # conv1 + input SiLU + FiLM + SiLU -> W-padded bf16 activation (B, H, W+2, C)
    g = _conv1_film(x_pad, prep["w1"], prep["b1"], scale1, shift, th=th)
    # conv2 + fused 1x1-conv shortcut -> bf16 (B, H, W, C); g row halo via BlockSpecs
    r = _conv2_shortcut(g, x_pad, prep["w2"], prep["b2"], prep["ws"], prep["bs"], th=th)

    if has_attn:
        r = _attention(r.reshape(bsz, h * w, c), prep, key_block=key_block)
        r = r.reshape(bsz, h, w, c)
    # TODO(synk): for tiny channel counts (Cout < 128) the out stores are masked
    # vst.msk; pad channels or fold W into the lane axis if that path matters.
    return jnp.transpose(r, (0, 3, 1, 2)).astype(jnp.float32)


# --------------------------------------------------------------------------
# Pure-JAX reference (mirrors the PyTorch forward) for the correctness check
# --------------------------------------------------------------------------
def upblock_reference(x, emb, p, has_attn=True):
    c = p["w1"].shape[0]
    dn = ("NCHW", "OIHW", "NCHW")
    silu = jax.nn.silu

    h = lax.conv_general_dilated(silu(x), p["w1"], (1, 1), "SAME", dimension_numbers=dn)
    h = h + p["b1"][None, :, None, None]
    eo = emb @ p["we"].T + p["be"]
    scale, shift = eo[:, :c], eo[:, c:]
    h = h * (1.0 + scale[:, :, None, None]) + shift[:, :, None, None]
    h = lax.conv_general_dilated(silu(h), p["w2"], (1, 1), "SAME", dimension_numbers=dn)
    h = h + p["b2"][None, :, None, None]
    sc = lax.conv_general_dilated(x, p["ws"], (1, 1), "SAME", dimension_numbers=dn)
    sc = sc + p["bs"][None, :, None, None]
    r = h + sc
    if not has_attn:
        return r

    B, C, H, W = r.shape
    xr = jnp.transpose(r.reshape(B, C, H * W), (0, 2, 1))           # (B, S, C)
    qkv = xr @ p["wp"].T + p["bp"]
    q, k, v = jnp.split(qkv, 3, axis=-1)
    attn = jnp.einsum("bid,bjd->bij", q, k) * (C ** -0.5)
    attn = jax.nn.softmax(attn, axis=1)                             # softmax over query axis
    res = jnp.einsum("bij,bjd->bid", attn, v)
    res = res @ p["wo"].T + p["bo"] + xr
    return jnp.transpose(res, (0, 2, 1)).reshape(B, C, H, W)


if __name__ == "__main__":
    key = jax.random.PRNGKey(0)
    in_channels, out_channels, cond_channels = 8, 8, 32
    B, H, W = 2, 16, 16

    kx, ke, kp = jax.random.split(key, 3)
    x = jax.random.normal(kx, (B, in_channels + out_channels, H, W), jnp.float32)
    emb = jax.random.normal(ke, (B, cond_channels), jnp.float32)
    params = init_params(kp, in_channels, out_channels, cond_channels)
    prep = prepare_params(params)   # layout/dtype conversion hoisted out of the forward

    # row_block=8 / key_block=128 so the row-halo (nb=2) and key-block (n_kb=2)
    # code paths are actually exercised at these small demo shapes.
    out = jax.block_until_ready(
        upblock_forward(x, emb, prep, has_attn=True, row_block=8, key_block=128))
    ref = jax.block_until_ready(upblock_reference(x, emb, params, has_attn=True))
    # bf16 storage of x/g/r + bf16 MXU operands (f32 accumulation) vs f32 reference.
    np.testing.assert_allclose(np.asarray(out), np.asarray(ref), rtol=6e-2, atol=6e-2)
    print("KERNEL_OK")
</pallas_src>

<mosaic_0001>
module attributes {stable_mosaic.version = 11 : i64} {
  func.func @_conv1_film_kernel(%arg0: i32, %arg1: i32, %arg2: memref<1x8x18x16xbf16, #tpu.memory_space<vmem>>, %arg3: memref<1x1x18x16xbf16, #tpu.memory_space<vmem>>, %arg4: memref<1x1x18x16xbf16, #tpu.memory_space<vmem>>, %arg5: memref<3x48x8xbf16, #tpu.memory_space<vmem>>, %arg6: memref<1x8xf32, #tpu.memory_space<vmem>>, %arg7: memref<1x1x8xf32, #tpu.memory_space<vmem>>, %arg8: memref<1x1x8xf32, #tpu.memory_space<vmem>>, %arg9: memref<1x8x18x8xbf16, #tpu.memory_space<vmem>>) attributes {dimension_semantics = [#tpu.dimension_semantics<parallel>, #tpu.dimension_semantics<parallel>], iteration_bounds = array<i64: 2, 2>, scalar_prefetch = 0 : i64, scratch_operands = 0 : i64, tpu.core_type = #tpu.core_type<tc>, window_params = [{transform_indices = @transform_0, window_bounds = array<i64: 1, 8, 18, 16>}, {transform_indices = @transform_1, window_bounds = array<i64: 1, 1, 18, 16>}, {transform_indices = @transform_2, window_bounds = array<i64: 1, 1, 18, 16>}, {pipeline_mode = #tpu.pipeline_mode<synchronous>, transform_indices = @transform_3, window_bounds = array<i64: 3, 48, 8>}, {pipeline_mode = #tpu.pipeline_mode<synchronous>, transform_indices = @transform_4, window_bounds = array<i64: 1, 8>}, {transform_indices = @transform_5, window_bounds = array<i64: 1, 1, 8>}, {transform_indices = @transform_6, window_bounds = array<i64: 1, 1, 8>}, {transform_indices = @transform_7, window_bounds = array<i64: 1, 8, 18, 8>}]} {
    %c0 = arith.constant 0 : index
    %c0_0 = arith.constant 0 : index
    %c0_1 = arith.constant 0 : index
    %c0_2 = arith.constant 0 : index
    %0 = vector.load %arg2[%c0, %c0_0, %c0_1, %c0_2] : memref<1x8x18x16xbf16, #tpu.memory_space<vmem>>, vector<1x8x18x16xbf16>
    %1 = vector.shape_cast %0 : vector<1x8x18x16xbf16> to vector<8x18x16xbf16>
    %c0_3 = arith.constant 0 : index
    %c0_4 = arith.constant 0 : index
    %c0_5 = arith.constant 0 : index
    %c0_6 = arith.constant 0 : index
    %2 = vector.load %arg3[%c0_3, %c0_4, %c0_5, %c0_6] : memref<1x1x18x16xbf16, #tpu.memory_space<vmem>>, vector<1x1x18x16xbf16>
    %3 = vector.shape_cast %2 : vector<1x1x18x16xbf16> to vector<1x18x16xbf16>
    %c0_7 = arith.constant 0 : index
    %c0_8 = arith.constant 0 : index
    %c0_9 = arith.constant 0 : index
    %c0_10 = arith.constant 0 : index
    %4 = vector.load %arg4[%c0_7, %c0_8, %c0_9, %c0_10] : memref<1x1x18x16xbf16, #tpu.memory_space<vmem>>, vector<1x1x18x16xbf16>
    %5 = vector.shape_cast %4 : vector<1x1x18x16xbf16> to vector<1x18x16xbf16>
    %6 = tpu.concatenate %1, %3, %5 in 0 : vector<8x18x16xbf16>, vector<1x18x16xbf16>, vector<1x18x16xbf16> -> vector<10x18x16xbf16>
    %7 = arith.extf %6 : vector<10x18x16xbf16> to vector<10x18x16xf32>
    %8 = arith.negf %7 : vector<10x18x16xf32>
    %9 = math.exp %8 : vector<10x18x16xf32>
    %cst = arith.constant 1.000000e+00 : f32
    %10 = vector.broadcast %cst : f32 to vector<10x18x16xf32>
    %11 = arith.addf %10, %9 : vector<10x18x16xf32>
    %12 = arith.divf %10, %11 : vector<10x18x16xf32>
    %13 = arith.mulf %7, %12 : vector<10x18x16xf32>
    %14 = arith.truncf %13 : vector<10x18x16xf32> to vector<10x18x16xbf16>
    %cst_11 = arith.constant 0.000000e+00 : f32
    %15 = vector.broadcast %cst_11 : f32 to vector<128x8xf32>
    %16 = vector.extract_strided_slice %14 {offsets = [0, 0, 0], sizes = [8, 18, 16], strides = [1, 1, 1]} : vector<10x18x16xbf16> to vector<8x18x16xbf16>
    %17 = vector.extract_strided_slice %16 {offsets = [0, 0, 0], sizes = [8, 16, 16], strides = [1, 1, 1]} : vector<8x18x16xbf16> to vector<8x16x16xbf16>
    %18 = vector.extract_strided_slice %16 {offsets = [0, 1, 0], sizes = [8, 16, 16], strides = [1, 1, 1]} : vector<8x18x16xbf16> to vector<8x16x16xbf16>
    %19 = vector.extract_strided_slice %16 {offsets = [0, 2, 0], sizes = [8, 16, 16], strides = [1, 1, 1]} : vector<8x18x16xbf16> to vector<8x16x16xbf16>
    %20 = tpu.concatenate %17, %18, %19 in 2 : vector<8x16x16xbf16>, vector<8x16x16xbf16>, vector<8x16x16xbf16> -> vector<8x16x48xbf16>
    %21 = vector.shape_cast %20 : vector<8x16x48xbf16> to vector<128x48xbf16>
    %c0_12 = arith.constant 0 : index
    %c0_13 = arith.constant 0 : index
    %c0_14 = arith.constant 0 : index
    %22 = vector.load %arg5[%c0_12, %c0_13, %c0_14] : memref<3x48x8xbf16, #tpu.memory_space<vmem>>, vector<1x48x8xbf16>
    %23 = vector.shape_cast %22 : vector<1x48x8xbf16> to vector<48x8xbf16>
    %cst_15 = arith.constant dense<0.000000e+00> : vector<128x8xf32>
    %24 = tpu.matmul %21, %23, %cst_15 {dimension_numbers = #tpu.dot_dimension_numbers<[1], [0], [0], [1], [0, 0, 1, 1], [], []>} : vector<128x48xbf16>, vector<48x8xbf16>, vector<128x8xf32> -> vector<128x8xf32>
    %25 = arith.addf %15, %24 : vector<128x8xf32>
    %26 = vector.extract_strided_slice %14 {offsets = [1, 0, 0], sizes = [8, 18, 16], strides = [1, 1, 1]} : vector<10x18x16xbf16> to vector<8x18x16xbf16>
    %27 = vector.extract_strided_slice %26 {offsets = [0, 0, 0], sizes = [8, 16, 16], strides = [1, 1, 1]} : vector<8x18x16xbf16> to vector<8x16x16xbf16>
    %28 = vector.extract_strided_slice %26 {offsets = [0, 1, 0], sizes = [8, 16, 16], strides = [1, 1, 1]} : vector<8x18x16xbf16> to vector<8x16x16xbf16>
    %29 = vector.extract_strided_slice %26 {offsets = [0, 2, 0], sizes = [8, 16, 16], strides = [1, 1, 1]} : vector<8x18x16xbf16> to vector<8x16x16xbf16>
    %30 = tpu.concatenate %27, %28, %29 in 2 : vector<8x16x16xbf16>, vector<8x16x16xbf16>, vector<8x16x16xbf16> -> vector<8x16x48xbf16>
    %31 = vector.shape_cast %30 : vector<8x16x48xbf16> to vector<128x48xbf16>
    %c1 = arith.constant 1 : index
    %c0_16 = arith.constant 0 : index
    %c0_17 = arith.constant 0 : index
    %32 = vector.load %arg5[%c1, %c0_16, %c0_17] : memref<3x48x8xbf16, #tpu.memory_space<vmem>>, vector<1x48x8xbf16>
    %33 = vector.shape_cast %32 : vector<1x48x8xbf16> to vector<48x8xbf16>
    %cst_18 = arith.constant dense<0.000000e+00> : vector<128x8xf32>
    %34 = tpu.matmul %31, %33, %cst_18 {dimension_numbers = #tpu.dot_dimension_numbers<[1], [0], [0], [1], [0, 0, 1, 1], [], []>} : vector<128x48xbf16>, vector<48x8xbf16>, vector<128x8xf32> -> vector<128x8xf32>
    %35 = arith.addf %25, %34 : vector<128x8xf32>
    %36 = vector.extract_strided_slice %14 {offsets = [2, 0, 0], sizes = [8, 18, 16], strides = [1, 1, 1]} : vector<10x18x16xbf16> to vector<8x18x16xbf16>
    %37 = vector.extract_strided_slice %36 {offsets = [0, 0, 0], sizes = [8, 16, 16], strides = [1, 1, 1]} : vector<8x18x16xbf16> to vector<8x16x16xbf16>
    %38 = vector.extract_strided_slice %36 {offsets = [0, 1, 0], sizes = [8, 16, 16], strides = [1, 1, 1]} : vector<8x18x16xbf16> to vector<8x16x16xbf16>
    %39 = vector.extract_strided_slice %36 {offsets = [0, 2, 0], sizes = [8, 16, 16], strides = [1, 1, 1]} : vector<8x18x16xbf16> to vector<8x16x16xbf16>
    %40 = tpu.concatenate %37, %38, %39 in 2 : vector<8x16x16xbf16>, vector<8x16x16xbf16>, vector<8x16x16xbf16> -> vector<8x16x48xbf16>
    %41 = vector.shape_cast %40 : vector<8x16x48xbf16> to vector<128x48xbf16>
    %c2 = arith.constant 2 : index
    %c0_19 = arith.constant 0 : index
    %c0_20 = arith.constant 0 : index
    %42 = vector.load %arg5[%c2, %c0_19, %c0_20] : memref<3x48x8xbf16, #tpu.memory_space<vmem>>, vector<1x48x8xbf16>
    %43 = vector.shape_cast %42 : vector<1x48x8xbf16> to vector<48x8xbf16>
    %cst_21 = arith.constant dense<0.000000e+00> : vector<128x8xf32>
    %44 = tpu.matmul %41, %43, %cst_21 {dimension_numbers = #tpu.dot_dimension_numbers<[1], [0], [0], [1], [0, 0, 1, 1], [], []>} : vector<128x48xbf16>, vector<48x8xbf16>, vector<128x8xf32> -> vector<128x8xf32>
    %45 = arith.addf %35, %44 : vector<128x8xf32>
    %c0_22 = arith.constant 0 : index
    %c0_23 = arith.constant 0 : index
    %46 = vector.load %arg6[%c0_22, %c0_23] : memref<1x8xf32, #tpu.memory_space<vmem>>, vector<1x8xf32>
    %47 = vector.broadcast %46 : vector<1x8xf32> to vector<128x8xf32>
    %48 = arith.addf %45, %47 : vector<128x8xf32>
    %c0_24 = arith.constant 0 : index
    %c0_25 = arith.constant 0 : index
    %c0_26 = arith.constant 0 : index
    %49 = vector.load %arg7[%c0_24, %c0_25, %c0_26] : memref<1x1x8xf32, #tpu.memory_space<vmem>>, vector<1x1x8xf32>
    %50 = vector.shape_cast %49 : vector<1x1x8xf32> to vector<1x8xf32>
    %51 = vector.broadcast %50 : vector<1x8xf32> to vector<128x8xf32>
    %52 = arith.mulf %48, %51 : vector<128x8xf32>
    %c0_27 = arith.constant 0 : index
    %c0_28 = arith.constant 0 : index
    %c0_29 = arith.constant 0 : index
    %53 = vector.load %arg8[%c0_27, %c0_28, %c0_29] : memref<1x1x8xf32, #tpu.memory_space<vmem>>, vector<1x1x8xf32>
    %54 = vector.shape_cast %53 : vector<1x1x8xf32> to vector<1x8xf32>
    %55 = vector.broadcast %54 : vector<1x8xf32> to vector<128x8xf32>
    %56 = arith.addf %52, %55 : vector<128x8xf32>
    %57 = arith.negf %56 : vector<128x8xf32>
    %58 = math.exp %57 : vector<128x8xf32>
    %cst_30 = arith.constant 1.000000e+00 : f32
    %59 = vector.broadcast %cst_30 : f32 to vector<128x8xf32>
    %60 = arith.addf %59, %58 : vector<128x8xf32>
    %61 = arith.divf %59, %60 : vector<128x8xf32>
    %62 = arith.mulf %56, %61 : vector<128x8xf32>
    %63 = vector.shape_cast %62 : vector<128x8xf32> to vector<8x16x8xf32>
    %64 = arith.truncf %63 : vector<8x16x8xf32> to vector<8x16x8xbf16>
    %cst_31 = arith.constant 0.000000e+00 : bf16
    %65 = vector.broadcast %cst_31 : bf16 to vector<8x1x8xbf16>
    %66 = tpu.concatenate %65, %64, %65 in 1 : vector<8x1x8xbf16>, vector<8x16x8xbf16>, vector<8x1x8xbf16> -> vector<8x18x8xbf16>
    %c0_32 = arith.constant 0 : index
    %c0_33 = arith.constant 0 : index
    %c0_34 = arith.constant 0 : index
    %c0_35 = arith.constant 0 : index
    %67 = vector.load %arg9[%c0_32, %c0_33, %c0_34, %c0_35] : memref<1x8x18x8xbf16, #tpu.memory_space<vmem>>, vector<1x8x18x8xbf16>
    %68 = vector.shape_cast %67 : vector<1x8x18x8xbf16> to vector<8x18x8xbf16>
    %69 = vector.shape_cast %66 : vector<8x18x8xbf16> to vector<1x8x18x8xbf16>
    tpu.vector_store %arg9[%c0_32, %c0_33, %c0_34, %c0_35], %69 {strides = array<i32>} : memref<1x8x18x8xbf16, #tpu.memory_space<vmem>>, vector<1x8x18x8xbf16>,
    return
  }
  func.func @transform_0(%arg0: i32, %arg1: i32) -> (i32, i32, i32, i32) {
    %c0_i32 = arith.constant 0 : i32
    %c0_i32_0 = arith.constant 0 : i32
    %c0_i32_1 = arith.constant 0 : i32
    return %arg0, %arg1, %c0_i32, %c0_i32_0 : i32, i32, i32, i32
  }
  func.func @transform_1(%arg0: i32, %arg1: i32) -> (i32, i32, i32, i32) {
    %c1_i32 = arith.constant 1 : i32
    %0 = arith.addi %arg1, %c1_i32 : i32
    %c8_i32 = arith.constant 8 : i32
    %1 = arith.muli %0, %c8_i32 : i32
    %c0_i32 = arith.constant 0 : i32
    %c0_i32_0 = arith.constant 0 : i32
    %c0_i32_1 = arith.constant 0 : i32
    return %arg0, %1, %c0_i32, %c0_i32_0 : i32, i32, i32, i32
  }
  func.func @transform_2(%arg0: i32, %arg1: i32) -> (i32, i32, i32, i32) {
    %c1_i32 = arith.constant 1 : i32
    %0 = arith.addi %arg1, %c1_i32 : i32
    %c8_i32 = arith.constant 8 : i32
    %1 = arith.muli %0, %c8_i32 : i32
    %c1_i32_0 = arith.constant 1 : i32
    %2 = arith.addi %1, %c1_i32_0 : i32
    %c0_i32 = arith.constant 0 : i32
    %c0_i32_1 = arith.constant 0 : i32
    %c0_i32_2 = arith.constant 0 : i32
    return %arg0, %2, %c0_i32, %c0_i32_1 : i32, i32, i32, i32
  }
  func.func @transform_3(%arg0: i32, %arg1: i32) -> (i32, i32, i32) {
    %c0_i32 = arith.constant 0 : i32
    %c0_i32_0 = arith.constant 0 : i32
    %c0_i32_1 = arith.constant 0 : i32
    %c0_i32_2 = arith.constant 0 : i32
    return %c0_i32, %c0_i32_0, %c0_i32_1 : i32, i32, i32
  }
  func.func @transform_4(%arg0: i32, %arg1: i32) -> (i32, i32) {
    %c0_i32 = arith.constant 0 : i32
    %c0_i32_0 = arith.constant 0 : i32
    %c0_i32_1 = arith.constant 0 : i32
    return %c0_i32, %c0_i32_0 : i32, i32
  }
  func.func @transform_5(%arg0: i32, %arg1: i32) -> (i32, i32, i32) {
    %c0_i32 = arith.constant 0 : i32
    %c0_i32_0 = arith.constant 0 : i32
    %c0_i32_1 = arith.constant 0 : i32
    return %arg0, %c0_i32, %c0_i32_0 : i32, i32, i32
  }
  func.func @transform_6(%arg0: i32, %arg1: i32) -> (i32, i32, i32) {
    %c0_i32 = arith.constant 0 : i32
    %c0_i32_0 = arith.constant 0 : i32
    %c0_i32_1 = arith.constant 0 : i32
    return %arg0, %c0_i32, %c0_i32_0 : i32, i32, i32
  }
  func.func @transform_7(%arg0: i32, %arg1: i32) -> (i32, i32, i32, i32) {
    %c0_i32 = arith.constant 0 : i32
    %c0_i32_0 = arith.constant 0 : i32
    %c0_i32_1 = arith.constant 0 : i32
    return %arg0, %arg1, %c0_i32, %c0_i32_0 : i32, i32, i32, i32
  }
}

</mosaic_0001>

<llo_original>
// kernel: tpu_custom_call.1
$region0: #{tpu_custom_call.1}
  #allocation0 [shape = 'u32[]', space=smem, size = 0x4, offset = 0x4, fixed_abs, tag = 'smem constant byte address 0x4 - core index']
  #allocation1 [shape = 'u32[144,128]{1,0:T(1,128)}', space=vmem, size = 0x12000, scoped, tag = 'internal scratch']
  %s0 = inlined_call_operand.vmem [shape: bf16[2,18,18,16], index: 0, kind: input, shape index: {}]
  %s1 = inlined_call_operand.vmem [shape: bf16[2,18,18,16], index: 1, kind: input, shape index: {}]
  %s2 = inlined_call_operand.vmem [shape: bf16[2,18,18,16], index: 2, kind: input, shape index: {}]
  %s3 = inlined_call_operand.vmem [shape: bf16[3,48,8], index: 3, kind: input, shape index: {}]
  %s4 = inlined_call_operand.vmem [shape: f32[1,8], index: 4, kind: input, shape index: {}]
  %s5 = inlined_call_operand.vmem [shape: f32[2,1,8], index: 5, kind: input, shape index: {}]
  %s6 = inlined_call_operand.vmem [shape: f32[2,1,8], index: 6, kind: input, shape index: {}]
  %s7 = inlined_call_operand.vmem [shape: bf16[2,16,18,8], index: 7, kind: output, shape index: {}]
  %s8 = sld [smem:[#allocation0]]
  $region61: #{tpu_custom_call.1} parent=0
    _
  %s10 = ssub.s32 1, %s8
  %s11 = scalar_select 0, %s10, %s8
  loop: start=0, step=1, limit=6
  $region2: #{tpu_custom_call.1} parent=0 // loop_pre_header
    _
  $region3: #{tpu_custom_call.1} parent=0 // loop_header
    %s13 = sphi 0, %s17
    %p14 = scmp.ge.s32.totalorder %s13, 6
    %s20 = sphi 0, %s32
    %s21 = sphi 0, %s28
    %s22 = sphi 0, %s20
    %s23 = sphi 0, %s21
    %s24 = sphi 0, %s22
    %s25 = sphi 0, %s23
    %s37 = sphi 0, %s39
    %s40 = sphi 0, %s37
    %s41 = sphi 0, %s40
    %s57 = sphi 0, %s41
    %s69 = sphi 0, %s71
    %s72 = sphi 0, %s69
    %s73 = sphi 0, %s72
    %s89 = sphi 0, %s73
    %s103 = sphi 0, %s105
    %s106 = sphi 0, %s103
    %s107 = sphi 0, %s106
    %s123 = sphi 0, %s107
    %s127 = sphi 0, %s127
    %s129 = sphi 0, %s127
    %s130 = sphi 0, %s129
    %s144 = sphi 0, %s130
    %s148 = sphi 0, %s148
    %s150 = sphi 0, %s148
    %s151 = sphi 0, %s150
    %s165 = sphi 0, %s151
    %s171 = sphi 0, %s173
    %s174 = sphi 0, %s171
    %s175 = sphi 0, %s174
    %s191 = sphi 0, %s175
    %s197 = sphi 0, %s199
    %s200 = sphi 0, %s197
    %s201 = sphi 0, %s200
    %s217 = sphi 0, %s201
    %s225 = sphi 0, %s227
    %s228 = sphi 0, %s225
    %s229 = sphi 0, %s228
    %s245 = sphi 0, %s229
  $region4: #{tpu_custom_call.1} parent=0 // loop_header_branch
    %16 = sbr.rel (%p14) target = $region8
  $region5: #{tpu_custom_call.1} parent=0 // loop_body
    %s18 = ssub.s32 %s13, 1
    %s19 = ssub.s32 %s13, 2
    %s26 = sadd.s32 1, %s21
    %p27 = scmp.ge.s32.totalorder %s26, 2
    %s28 = scalar_select %p27, 0, %s26
    %s29 = sadd.s32 1, %s20
    %s30 = scalar_select %p27, %s29, %s20
    %p31 = scmp.ge.s32.totalorder %s30, 2
    %s32 = scalar_select %p31, 0, %s30
    %s33 = ssub.s32 %s20, %s32
    %s34 = ssub.s32 %s21, %s28
    %s35 = sor.u32 %s33, %s34
    %p36 = scmp.eq.s32.totalorder %s35, 0
    %s38 = sadd.s32 %s37, 1
    %s39 = scalar_select %p36, %s37, %s38
    %p42 = pneg %p36
    %p43 = scmp.eq.s32.totalorder %s13, 3
    %p44 = por %p42, %p43
    %p45 = scmp.ne.s32.totalorder %s37, %s40
    %p46 = scmp.eq.s32.totalorder %s13, 0
    %p47 = por %p45, %p46
    %p48 = scmp.ne.s32.totalorder %s37, %s40
    %p49 = scmp.eq.s32.totalorder %s18, 3
    %p50 = por %p48, %p49
    %p51 = scmp.ne.s32.totalorder %s40, %s41
    %p52 = scmp.eq.s32.totalorder %s18, 0
    %p53 = por %p51, %p52
    %p54 = scmp.ne.s32.totalorder %s40, %s41
    %p55 = scmp.eq.s32.totalorder %s19, 3
    %p56 = por %p54, %p55
    %p58 = scmp.ne.s32.totalorder %s41, %s57
    %p59 = scmp.eq.s32.totalorder %s19, 0
    %p60 = por %p58, %p59
    %s61 = sadd.s32 %s21, 1
    %s62 = smul.u32 %s61, 8
    %s63 = sadd.s32 %s28, 1
    %s64 = smul.u32 %s63, 8
    %s65 = ssub.s32 %s20, %s32
    %s66 = ssub.s32 %s62, %s64
    %s67 = sor.u32 %s65, %s66
    %p68 = scmp.eq.s32.totalorder %s67, 0
    %s70 = sadd.s32 %s69, 1
    %s71 = scalar_select %p68, %s69, %s70
    %p74 = pneg %p68
    %p75 = scmp.eq.s32.totalorder %s13, 3
    %p76 = por %p74, %p75
    %p77 = scmp.ne.s32.totalorder %s69, %s72
    %p78 = scmp.eq.s32.totalorder %s13, 0
    %p79 = por %p77, %p78
    %p80 = scmp.ne.s32.totalorder %s69, %s72
    %p81 = scmp.eq.s32.totalorder %s18, 3
    %p82 = por %p80, %p81
    %p83 = scmp.ne.s32.totalorder %s72, %s73
    %p84 = scmp.eq.s32.totalorder %s18, 0
    %p85 = por %p83, %p84
    %p86 = scmp.ne.s32.totalorder %s72, %s73
    %p87 = scmp.eq.s32.totalorder %s19, 3
    %p88 = por %p86, %p87
    %p90 = scmp.ne.s32.totalorder %s73, %s89
    %p91 = scmp.eq.s32.totalorder %s19, 0
    %p92 = por %p90, %p91
    %s93 = sadd.s32 %s21, 1
    %s94 = smul.u32 %s93, 8
    %s95 = sadd.s32 %s94, 1
    %s96 = sadd.s32 %s28, 1
    %s97 = smul.u32 %s96, 8
    %s98 = sadd.s32 %s97, 1
    %s99 = ssub.s32 %s20, %s32
    %s100 = ssub.s32 %s95, %s98
    %s101 = sor.u32 %s99, %s100
    %p102 = scmp.eq.s32.totalorder %s101, 0
    %s104 = sadd.s32 %s103, 1
    %s105 = scalar_select %p102, %s103, %s104
    %p108 = pneg %p102
    %p109 = scmp.eq.s32.totalorder %s13, 3
    %p110 = por %p108, %p109
    %p111 = scmp.ne.s32.totalorder %s103, %s106
    %p112 = scmp.eq.s32.totalorder %s13, 0
    %p113 = por %p111, %p112
    %p114 = scmp.ne.s32.totalorder %s103, %s106
    %p115 = scmp.eq.s32.totalorder %s18, 3
    %p116 = por %p114, %p115
    %p117 = scmp.ne.s32.totalorder %s106, %s107
    %p118 = scmp.eq.s32.totalorder %s18, 0
    %p119 = por %p117, %p118
    %p120 = scmp.ne.s32.totalorder %s106, %s107
    %p121 = scmp.eq.s32.totalorder %s19, 3
    %p122 = por %p120, %p121
    %p124 = scmp.ne.s32.totalorder %s107, %s123
    %p125 = scmp.eq.s32.totalorder %s19, 0
    %p126 = por %p124, %p125
    %s128 = sadd.s32 %s127, 1
    %p131 = scmp.eq.s32.totalorder %s13, 3
    %p132 = scmp.ne.s32.totalorder %s127, %s129
    %p133 = scmp.eq.s32.totalorder %s13, 0
    %p134 = por %p132, %p133
    %p135 = scmp.ne.s32.totalorder %s127, %s129
    %p136 = scmp.eq.s32.totalorder %s18, 3
    %p137 = por %p135, %p136
    %p138 = scmp.ne.s32.totalorder %s129, %s130
    %p139 = scmp.eq.s32.totalorder %s18, 0
    %p140 = por %p138, %p139
    %p141 = scmp.ne.s32.totalorder %s129, %s130
    %p142 = scmp.eq.s32.totalorder %s19, 3
    %p143 = por %p141, %p142
    %p145 = scmp.ne.s32.totalorder %s130, %s144
    %p146 = scmp.eq.s32.totalorder %s19, 0
    %p147 = por %p145, %p146
    %s149 = sadd.s32 %s148, 1
    %p152 = scmp.eq.s32.totalorder %s13, 3
    %p153 = scmp.ne.s32.totalorder %s148, %s150
    %p154 = scmp.eq.s32.totalorder %s13, 0
    %p155 = por %p153, %p154
    %p156 = scmp.ne.s32.totalorder %s148, %s150
    %p157 = scmp.eq.s32.totalorder %s18, 3
    %p158 = por %p156, %p157
    %p159 = scmp.ne.s32.totalorder %s150, %s151
    %p160 = scmp.eq.s32.totalorder %s18, 0
    %p161 = por %p159, %p160
    %p162 = scmp.ne.s32.totalorder %s150, %s151
    %p163 = scmp.eq.s32.totalorder %s19, 3
    %p164 = por %p162, %p163
    %p166 = scmp.ne.s32.totalorder %s151, %s165
    %p167 = scmp.eq.s32.totalorder %s19, 0
    %p168 = por %p166, %p167
    %s169 = ssub.s32 %s20, %s32
    %p170 = scmp.eq.s32.totalorder %s169, 0
    %s172 = sadd.s32 %s171, 1
    %s173 = scalar_select %p170, %s171, %s172
    %p176 = pneg %p170
    %p177 = scmp.eq.s32.totalorder %s13, 3
    %p178 = por %p176, %p177
    %p179 = scmp.ne.s32.totalorder %s171, %s174
    %p180 = scmp.eq.s32.totalorder %s13, 0
    %p181 = por %p179, %p180
    %p182 = scmp.ne.s32.totalorder %s171, %s174
    %p183 = scmp.eq.s32.totalorder %s18, 3
    %p184 = por %p182, %p183
    %p185 = scmp.ne.s32.totalorder %s174, %s175
    %p186 = scmp.eq.s32.totalorder %s18, 0
    %p187 = por %p185, %p186
    %p188 = scmp.ne.s32.totalorder %s174, %s175
    %p189 = scmp.eq.s32.totalorder %s19, 3
    %p190 = por %p188, %p189
    %p192 = scmp.ne.s32.totalorder %s175, %s191
    %p193 = scmp.eq.s32.totalorder %s19, 0
    %p194 = por %p192, %p193
    %s195 = ssub.s32 %s20, %s32
    %p196 = scmp.eq.s32.totalorder %s195, 0
    %s198 = sadd.s32 %s197, 1
    %s199 = scalar_select %p196, %s197, %s198
    %p202 = pneg %p196
    %p203 = scmp.eq.s32.totalorder %s13, 3
    %p204 = por %p202, %p203
    %p205 = scmp.ne.s32.totalorder %s197, %s200
    %p206 = scmp.eq.s32.totalorder %s13, 0
    %p207 = por %p205, %p206
    %p208 = scmp.ne.s32.totalorder %s197, %s200
    %p209 = scmp.eq.s32.totalorder %s18, 3
    %p210 = por %p208, %p209
    %p211 = scmp.ne.s32.totalorder %s200, %s201
    %p212 = scmp.eq.s32.totalorder %s18, 0
    %p213 = por %p211, %p212
    %p214 = scmp.ne.s32.totalorder %s200, %s201
    %p215 = scmp.eq.s32.totalorder %s19, 3
    %p216 = por %p214, %p215
    %p218 = scmp.ne.s32.totalorder %s201, %s217
    %p219 = scmp.eq.s32.totalorder %s19, 0
    %p220 = por %p218, %p219
    %s221 = ssub.s32 %s20, %s32
    %s222 = ssub.s32 %s21, %s28
    %s223 = sor.u32 %s221, %s222
    %p224 = scmp.eq.s32.totalorder %s223, 0
    %s226 = sadd.s32 %s225, 1
    %s227 = scalar_select %p224, %s225, %s226
    %p230 = pneg %p224
    %p231 = scmp.eq.s32.totalorder %s13, 3
    %p232 = por %p230, %p231
    %p233 = scmp.ne.s32.totalorder %s225, %s228
    %p234 = scmp.eq.s32.totalorder %s13, 0
    %p235 = por %p233, %p234
    %p236 = scmp.ne.s32.totalorder %s225, %s228
    %p237 = scmp.eq.s32.totalorder %s18, 3
    %p238 = por %p236, %p237
    %p239 = scmp.ne.s32.totalorder %s228, %s229
    %p240 = scmp.eq.s32.totalorder %s18, 0
    %p241 = por %p239, %p240
    %p242 = scmp.ne.s32.totalorder %s228, %s229
    %p243 = scmp.eq.s32.totalorder %s19, 3
    %p244 = por %p242, %p243
    %p246 = scmp.ne.s32.totalorder %s229, %s245
    %p247 = scmp.eq.s32.totalorder %s19, 0
    %p248 = por %p246, %p247
    %p249 = scmp.le.s32.totalorder 1, %s13
    %p250 = scmp.lt.s32.totalorder %s13, 5
    %p251 = pnand %p249, %p250
    %p252 = pneg %p251
    // Predicated region
    $region9: #{tpu_custom_call.1} parent=5 // pred_check
      _
    $region10: #{tpu_custom_call.1} parent=5 // pred_check_branch
      %254 = sbr.rel (%p251) target = $region12
    $region11: #{tpu_custom_call.1} parent=5 // pred_region
      %s255 = ssub.s32 %s13, 1
      // Predicated region
      $region13: #{tpu_custom_call.1} parent=11 // pred_check
        %p256 = pneg %p140
      $region14: #{tpu_custom_call.1} parent=11 // pred_check_branch
        %258 = sbr.rel (%p256) target = $region16
      $region15: #{tpu_custom_call.1} parent=11 // pred_region
        _
      $region16: #{tpu_custom_call.1} parent=11 // pred_fallthru
        _
      // Predicated region
      $region17: #{tpu_custom_call.1} parent=11 // pred_check
        %p259 = pneg %p161
      $region18: #{tpu_custom_call.1} parent=11 // pred_check_branch
        %261 = sbr.rel (%p259) target = $region20
      $region19: #{tpu_custom_call.1} parent=11 // pred_region
        _
      $region20: #{tpu_custom_call.1} parent=11 // pred_fallthru
        _
    $region12: #{tpu_custom_call.1} parent=5 // pred_fallthru
      _
    %p262 = scmp.lt.s32.totalorder %s13, 4
    // Predicated region
    $region21: #{tpu_custom_call.1} parent=5 // pred_check
      %p263 = pneg %p262
    $region22: #{tpu_custom_call.1} parent=5 // pred_check_branch
      %265 = sbr.rel (%p263) target = $region24
    $region23: #{tpu_custom_call.1} parent=5 // pred_region
      // Predicated region
      $region25: #{tpu_custom_call.1} parent=23 // pred_check
        %p266 = pneg %p47
      $region26: #{tpu_custom_call.1} parent=23 // pred_check_branch
        %268 = sbr.rel (%p266) target = $region28
      $region27: #{tpu_custom_call.1} parent=23 // pred_region
        %s269 = smul.u32 8, %s21
        %s270 = ssub.s32 18, %s269
        %p271 = scmp.lt.s32.totalorder %s270, 8
        %s272 = scalar_select %p271, %s270, 8
        %s273 = smul.u32 64, %s272
        %s274 = smul.u32 %s273, 3
        %p275 = scmp.lt.s32.totalorder %s20, 1
        %s276 = scalar_select %p275, %s20, 1
        %p277 = scmp.lt.s32.totalorder %s269, 17
        %s278 = scalar_select %p277, %s269, 17
        %s279 = smul.addr %s278, 3
        %s280 = smul.addr %s276, 54
        %s281 = sadd.s32 %s279, %s280
        %s282 = smul.addr %s281, 4
        %s283 = scalar_lea.vmem %s0, %s282
        %s284 = smul.u32 8, %s21
        %s285 = ssub.s32 18, %s284
        %p286 = scmp.lt.s32.totalorder %s285, 8
        %s287 = scalar_select %p286, %s285, 8
        %s288 = smul.u32 64, %s287
        %s289 = smul.u32 %s288, 3
      $region28: #{tpu_custom_call.1} parent=23 // pred_fallthru
        _
      // Predicated region
      $region29: #{tpu_custom_call.1} parent=23 // pred_check
        %p290 = pneg %p79
      $region30: #{tpu_custom_call.1} parent=23 // pred_check_branch
        %292 = sbr.rel (%p290) target = $region32
      $region31: #{tpu_custom_call.1} parent=23 // pred_region
        %s293 = sadd.s32 %s21, 1
        %s294 = smul.u32 %s293, 8
        %p295 = scmp.lt.s32.totalorder %s20, 1
        %s296 = scalar_select %p295, %s20, 1
        %p297 = scmp.lt.s32.totalorder %s294, 17
        %s298 = scalar_select %p297, %s294, 17
        %s299 = smul.addr %s298, 3
        %s300 = smul.addr %s296, 54
        %s301 = sadd.s32 %s299, %s300
        %s302 = smul.addr %s301, 4
        %s303 = scalar_lea.vmem %s1, %s302
        %s304 = sadd.s32 %s21, 1
        %s305 = smul.u32 %s304, 8
      $region32: #{tpu_custom_call.1} parent=23 // pred_fallthru
        _
      // Predicated region
      $region33: #{tpu_custom_call.1} parent=23 // pred_check
        %p306 = pneg %p113
      $region34: #{tpu_custom_call.1} parent=23 // pred_check_branch
        %308 = sbr.rel (%p306) target = $region36
      $region35: #{tpu_custom_call.1} parent=23 // pred_region
        %s309 = sadd.s32 %s21, 1
        %s310 = smul.u32 %s309, 8
        %s311 = sadd.s32 %s310, 1
        %p312 = scmp.lt.s32.totalorder %s20, 1
        %s313 = scalar_select %p312, %s20, 1
        %p314 = scmp.lt.s32.totalorder %s311, 17
        %s315 = scalar_select %p314, %s311, 17
        %s316 = smul.addr %s315, 3
        %s317 = smul.addr %s313, 54
        %s318 = sadd.s32 %s316, %s317
        %s319 = smul.addr %s318, 4
        %s320 = scalar_lea.vmem %s2, %s319
        %s321 = sadd.s32 %s21, 1
        %s322 = smul.u32 %s321, 8
        %s323 = sadd.s32 %s322, 1
      $region36: #{tpu_custom_call.1} parent=23 // pred_fallthru
        _
      // Predicated region
      $region37: #{tpu_custom_call.1} parent=23 // pred_check
        %p324 = pneg %p181
      $region38: #{tpu_custom_call.1} parent=23 // pred_check_branch
        %326 = sbr.rel (%p324) target = $region40
      $region39: #{tpu_custom_call.1} parent=23 // pred_region
        %p327 = scmp.lt.s32.totalorder %s20, 1
        %s328 = scalar_select %p327, %s20, 1
        %s329 = scalar_lea.vmem %s5, %s328
      $region40: #{tpu_custom_call.1} parent=23 // pred_fallthru
        _
      // Predicated region
      $region41: #{tpu_custom_call.1} parent=23 // pred_check
        %p330 = pneg %p207
      $region42: #{tpu_custom_call.1} parent=23 // pred_check_branch
        %332 = sbr.rel (%p330) target = $region44
      $region43: #{tpu_custom_call.1} parent=23 // pred_region
        %p333 = scmp.lt.s32.totalorder %s20, 1
        %s334 = scalar_select %p333, %s20, 1
        %s335 = scalar_lea.vmem %s6, %s334
      $region44: #{tpu_custom_call.1} parent=23 // pred_fallthru
        _
    $region24: #{tpu_custom_call.1} parent=5 // pred_fallthru
      _
    %p336 = scmp.le.s32.totalorder 1, %s13
    %p337 = scmp.lt.s32.totalorder %s13, 5
    %p338 = pnand %p336, %p337
    %p339 = pneg %p338
    // Predicated region
    $region45: #{tpu_custom_call.1} parent=5 // pred_check
      _
    $region46: #{tpu_custom_call.1} parent=5 // pred_check_branch
      %341 = sbr.rel (%p338) target = $region48
    $region47: #{tpu_custom_call.1} parent=5 // pred_region
      %s342 = ssub.s32 %s13, 1
      %s343 = smul.u32 8, %s23
      %s344 = ssub.s32 18, %s343
      %p345 = scmp.lt.s32.totalorder %s344, 8
      %s346 = scalar_select %p345, %s344, 8
      %s347 = smul.u32 64, %s346
      %s348 = smul.u32 %s347, 3
      %p349 = scmp.lt.s32.totalorder %s22, 1
      %s350 = scalar_select %p349, %s22, 1
      %p351 = scmp.lt.s32.totalorder %s343, 17
      %s352 = scalar_select %p351, %s343, 17
      %s353 = smul.addr %s352, 3
      %s354 = smul.addr %s350, 54
      %s355 = sadd.s32 %s353, %s354
      %s356 = smul.addr %s355, 4
      %s357 = scalar_lea.vmem %s0, %s356
      %p358 = pneg %p53
      %p359 = pneg %p50
      %s360 = sadd.s32 %s23, 1
      %s361 = smul.u32 %s360, 8
      %p362 = scmp.lt.s32.totalorder %s22, 1
      %s363 = scalar_select %p362, %s22, 1
      %p364 = scmp.lt.s32.totalorder %s361, 17
      %s365 = scalar_select %p364, %s361, 17
      %s366 = smul.addr %s365, 3
      %s367 = smul.addr %s363, 54
      %s368 = sadd.s32 %s366, %s367
      %s369 = smul.addr %s368, 4
      %s370 = scalar_lea.vmem %s1, %s369
      %p371 = pneg %p85
      %p372 = pneg %p82
      %s373 = sadd.s32 %s23, 1
      %s374 = smul.u32 %s373, 8
      %s375 = sadd.s32 %s374, 1
      %p376 = scmp.lt.s32.totalorder %s22, 1
      %s377 = scalar_select %p376, %s22, 1
      %p378 = scmp.lt.s32.totalorder %s375, 17
      %s379 = scalar_select %p378, %s375, 17
      %s380 = smul.addr %s379, 3
      %s381 = smul.addr %s377, 54
      %s382 = sadd.s32 %s380, %s381
      %s383 = smul.addr %s382, 4
      %s384 = scalar_lea.vmem %s2, %s383
      %p385 = pneg %p119
      %p386 = pneg %p116
      %p387 = pneg %p140
      %p388 = pneg %p137
      %p389 = pneg %p161
      %p390 = pneg %p158
      %p391 = scmp.lt.s32.totalorder %s22, 1
      %s392 = scalar_select %p391, %s22, 1
      %s393 = scalar_lea.vmem %s5, %s392
      %p394 = pneg %p187
      %p395 = pneg %p184
      %p396 = scmp.lt.s32.totalorder %s22, 1
      %s397 = scalar_select %p396, %s22, 1
      %s398 = scalar_lea.vmem %s6, %s397
      %p399 = pneg %p213
      %p400 = pneg %p210
      %p401 = pneg %p241
      %p402 = pneg %p238
      %s403 = smul.u32 8, %s23
      %p404 = scmp.lt.s32.totalorder %s22, 1
      %s405 = scalar_select %p404, %s22, 1
      %p406 = scmp.lt.s32.totalorder %s403, 15
      %s407 = scalar_select %p406, %s403, 15
      %s408 = smul.addr %s407, 3
      %s409 = smul.addr %s405, 48
      %s410 = sadd.s32 %s408, %s409
      %s411 = smul.addr %s410, 4
      %s412 = scalar_lea.vmem %s7, %s411
      %s413 = smul.u32 8, %s23
      %s414 = ssub.s32 18, %s413
      %p415 = scmp.lt.s32.totalorder %s414, 8
      %s416 = scalar_select %p415, %s414, 8
      %s417 = smul.u32 64, %s416
      %s418 = smul.u32 %s417, 3
      %p419 = scmp.lt.s32.totalorder %s22, 1
      %s420 = scalar_select %p419, %s22, 1
      %p421 = scmp.lt.s32.totalorder %s413, 17
      %s422 = scalar_select %p421, %s413, 17
      %s423 = smul.addr %s422, 3
      %s424 = smul.addr %s420, 54
      %s425 = sadd.s32 %s423, %s424
      %s426 = smul.addr %s425, 4
      %s427 = scalar_lea.vmem %s0, %s426
      %s428 = smul.u32 8, %s23
      %s429 = ssub.s32 18, %s428
      %p430 = scmp.lt.s32.totalorder %s429, 8
      %s431 = scalar_select %p430, %s429, 8
      %s432 = smul.u32 64, %s431
      %s433 = smul.u32 %s432, 3
      %s434 = sadd.s32 %s23, 1
      %s435 = smul.u32 %s434, 8
      %p436 = scmp.lt.s32.totalorder %s22, 1
      %s437 = scalar_select %p436, %s22, 1
      %p438 = scmp.lt.s32.totalorder %s435, 17
      %s439 = scalar_select %p438, %s435, 17
      %s440 = smul.addr %s439, 3
      %s441 = smul.addr %s437, 54
      %s442 = sadd.s32 %s440, %s441
      %s443 = smul.addr %s442, 4
      %s444 = scalar_lea.vmem %s1, %s443
      %s445 = sadd.s32 %s23, 1
      %s446 = smul.u32 %s445, 8
      %s447 = sadd.s32 %s23, 1
      %s448 = smul.u32 %s447, 8
      %s449 = sadd.s32 %s448, 1
      %p450 = scmp.lt.s32.totalorder %s22, 1
      %s451 = scalar_select %p450, %s22, 1
      %p452 = scmp.lt.s32.totalorder %s449, 17
      %s453 = scalar_select %p452, %s449, 17
      %s454 = smul.addr %s453, 3
      %s455 = smul.addr %s451, 54
      %s456 = sadd.s32 %s454, %s455
      %s457 = smul.addr %s456, 4
      %s458 = scalar_lea.vmem %s2, %s457
      %s459 = sadd.s32 %s23, 1
      %s460 = smul.u32 %s459, 8
      %s461 = sadd.s32 %s460, 1
      %p462 = scmp.lt.s32.totalorder %s22, 1
      %s463 = scalar_select %p462, %s22, 1
      %s464 = scalar_lea.vmem %s5, %s463
      %p465 = scmp.lt.s32.totalorder %s22, 1
      %s466 = scalar_select %p465, %s22, 1
      %s467 = scalar_lea.vmem %s6, %s466
      %s468 = smul.u32 8, %s23
      %p469 = scmp.lt.s32.totalorder %s22, 1
      %s470 = scalar_select %p469, %s22, 1
      %p471 = scmp.lt.s32.totalorder %s468, 15
      %s472 = scalar_select %p471, %s468, 15
      %s473 = smul.addr %s472, 3
      %s474 = smul.addr %s470, 48
      %s475 = sadd.s32 %s473, %s474
      %s476 = smul.addr %s475, 4
      %s477 = scalar_lea.vmem %s7, %s476
      %s478 = smul.u32 8, %s23
      %v480 = vld [vmem:[%s427] sm:$0xf]
      %v481 = vld [vmem:[%s427 + $0x4] sm:$0xf]
      %v482 = vld [vmem:[%s427 + $0x8] sm:$0x1]
      %v483 = vld [vmem:[%s427 + $0xc] sm:$0xf]
      %v484 = vld [vmem:[%s427 + $0x10] sm:$0xf]
      %v485 = vld [vmem:[%s427 + $0x14] sm:$0x1]
      %v486 = vld [vmem:[%s427 + $0x18] sm:$0xf]
      %v487 = vld [vmem:[%s427 + $0x1c] sm:$0xf]
      %v488 = vld [vmem:[%s427 + $0x20] sm:$0x1]
      %v489 = vld [vmem:[%s427 + $0x24] sm:$0xf]
      %v490 = vld [vmem:[%s427 + $0x28] sm:$0xf]
      %v491 = vld [vmem:[%s427 + $0x2c] sm:$0x1]
      %v492 = vld [vmem:[%s427 + $0x30] sm:$0xf]
      %v493 = vld [vmem:[%s427 + $0x34] sm:$0xf]
      %v494 = vld [vmem:[%s427 + $0x38] sm:$0x1]
      %v495 = vld [vmem:[%s427 + $0x3c] sm:$0xf]
      %v496 = vld [vmem:[%s427 + $0x40] sm:$0xf]
      %v497 = vld [vmem:[%s427 + $0x44] sm:$0x1]
      %v498 = vld [vmem:[%s427 + $0x48] sm:$0xf]
      %v499 = vld [vmem:[%s427 + $0x4c] sm:$0xf]
      %v500 = vld [vmem:[%s427 + $0x50] sm:$0x1]
      %v501 = vld [vmem:[%s427 + $0x54] sm:$0xf]
      %v502 = vld [vmem:[%s427 + $0x58] sm:$0xf]
      %v503 = vld [vmem:[%s427 + $0x5c] sm:$0x1]
      %v504 = vld [vmem:[%s444] sm:$0xf]
      %v505 = vld [vmem:[%s444 + $0x4] sm:$0xf]
      %v506 = vld [vmem:[%s444 + $0x8] sm:$0x1]
      %v507 = vld [vmem:[%s458] sm:$0xf]
      %v508 = vld [vmem:[%s458 + $0x4] sm:$0xf]
      %v509 = vld [vmem:[%s458 + $0x8] sm:$0x1]
      %v510 = vunpack.c.l.bf16 %v480
      %v511 = vunpack.c.l.bf16 %v481
      %v512 = vunpack.c.l.bf16 %v482
      %v513 = vunpack.c.l.bf16 %v483
      %v514 = vunpack.c.l.bf16 %v484
      %v515 = vunpack.c.l.bf16 %v485
      %v516 = vunpack.c.l.bf16 %v486
      %v517 = vunpack.c.l.bf16 %v487
      %v518 = vunpack.c.l.bf16 %v488
      %v519 = vunpack.c.l.bf16 %v489
      %v520 = vunpack.c.l.bf16 %v490
      %v521 = vunpack.c.l.bf16 %v491
      %v522 = vunpack.c.l.bf16 %v492
      %v523 = vunpack.c.l.bf16 %v493
      %v524 = vunpack.c.l.bf16 %v494
      %v525 = vunpack.c.l.bf16 %v495
      %v526 = vunpack.c.l.bf16 %v496
      %v527 = vunpack.c.l.bf16 %v497
      %v528 = vunpack.c.l.bf16 %v498
      %v529 = vunpack.c.l.bf16 %v499
      %v530 = vunpack.c.l.bf16 %v500
      %v531 = vunpack.c.l.bf16 %v501
      %v532 = vunpack.c.l.bf16 %v502
      %v533 = vunpack.c.l.bf16 %v503
      %v534 = vunpack.c.l.bf16 %v504
      %v535 = vunpack.c.l.bf16 %v505
      %v536 = vunpack.c.l.bf16 %v506
      %v537 = vunpack.c.l.bf16 %v507
      %v538 = vunpack.c.l.bf16 %v508
      %v539 = vunpack.c.l.bf16 %v509
      %v540 = vxor.u32 %v510, 2147483648
      %v541 = vxor.u32 %v511, 2147483648
      %v542 = vxor.u32 %v512, 2147483648
      %v543 = vxor.u32 %v513, 2147483648
      %v544 = vxor.u32 %v514, 2147483648
      %v545 = vxor.u32 %v515, 2147483648
      %v546 = vxor.u32 %v516, 2147483648
      %v547 = vxor.u32 %v517, 2147483648
      %v548 = vxor.u32 %v518, 2147483648
      %v549 = vxor.u32 %v519, 2147483648
      %v550 = vxor.u32 %v520, 2147483648
      %v551 = vxor.u32 %v521, 2147483648
      %v552 = vxor.u32 %v522, 2147483648
      %v553 = vxor.u32 %v523, 2147483648
      %v554 = vxor.u32 %v524, 2147483648
      %v555 = vxor.u32 %v525, 2147483648
      %v556 = vxor.u32 %v526, 2147483648
      %v557 = vxor.u32 %v527, 2147483648
      %v558 = vxor.u32 %v528, 2147483648
      %v559 = vxor.u32 %v529, 2147483648
      %v560 = vxor.u32 %v530, 2147483648
      %v561 = vxor.u32 %v531, 2147483648
      %v562 = vxor.u32 %v532, 2147483648
      %v563 = vxor.u32 %v533, 2147483648
      %v564 = vxor.u32 %v534, 2147483648
      %v565 = vxor.u32 %v535, 2147483648
      %v566 = vxor.u32 %v536, 2147483648
      %v567 = vxor.u32 %v537, 2147483648
      %v568 = vxor.u32 %v538, 2147483648
      %v569 = vxor.u32 %v539, 2147483648
      %v570 = vmul.f32 %v540, 1.442695
      %v571 = vpow.pop %v570
      %v572 = vmul.f32 %v541, 1.442695
      %v573 = vpow.pop %v572
      %v574 = vmul.f32 %v542, 1.442695
      %v575 = vpow.pop %v574
      %v576 = vmul.f32 %v543, 1.442695
      %v577 = vpow.pop %v576
      %v578 = vmul.f32 %v544, 1.442695
      %v579 = vpow.pop %v578
      %v580 = vmul.f32 %v545, 1.442695
      %v581 = vpow.pop %v580
      %v582 = vmul.f32 %v546, 1.442695
      %v583 = vpow.pop %v582
      %v584 = vmul.f32 %v547, 1.442695
      %v585 = vpow.pop %v584
      %v586 = vmul.f32 %v548, 1.442695
      %v587 = vpow.pop %v586
      %v588 = vmul.f32 %v549, 1.442695
      %v589 = vpow.pop %v588
      %v590 = vmul.f32 %v550, 1.442695
      %v591 = vpow.pop %v590
      %v592 = vmul.f32 %v551, 1.442695
      %v593 = vpow.pop %v592
      %v594 = vmul.f32 %v552, 1.442695
      %v595 = vpow.pop %v594
      %v596 = vmul.f32 %v553, 1.442695
      %v597 = vpow.pop %v596
      %v598 = vmul.f32 %v554, 1.442695
      %v599 = vpow.pop %v598
      %v600 = vmul.f32 %v555, 1.442695
      %v601 = vpow.pop %v600
      %v602 = vmul.f32 %v556, 1.442695
      %v603 = vpow.pop %v602
      %v604 = vmul.f32 %v557, 1.442695
      %v605 = vpow.pop %v604
      %v606 = vmul.f32 %v558, 1.442695
      %v607 = vpow.pop %v606
      %v608 = vmul.f32 %v559, 1.442695
      %v609 = vpow.pop %v608
      %v610 = vmul.f32 %v560, 1.442695
      %v611 = vpow.pop %v610
      %v612 = vmul.f32 %v561, 1.442695
      %v613 = vpow.pop %v612
      %v614 = vmul.f32 %v562, 1.442695
      %v615 = vpow.pop %v614
      %v616 = vmul.f32 %v563, 1.442695
      %v617 = vpow.pop %v616
      %v618 = vmul.f32 %v564, 1.442695
      %v619 = vpow.pop %v618
      %v620 = vmul.f32 %v565, 1.442695
      %v621 = vpow.pop %v620
      %v622 = vmul.f32 %v566, 1.442695
      %v623 = vpow.pop %v622
      %v624 = vmul.f32 %v567, 1.442695
      %v625 = vpow.pop %v624
      %v626 = vmul.f32 %v568, 1.442695
      %v627 = vpow.pop %v626
      %v628 = vmul.f32 %v569, 1.442695
      %v629 = vpow.pop %v628
      %v630 = vadd.f32 %v571, 1.0
      %v631 = vadd.f32 %v573, 1.0
      %v632 = vadd.f32 %v575, 1.0
      %v633 = vadd.f32 %v577, 1.0
      %v634 = vadd.f32 %v579, 1.0
      %v635 = vadd.f32 %v581, 1.0
      %v636 = vadd.f32 %v583, 1.0
      %v637 = vadd.f32 %v585, 1.0
      %v638 = vadd.f32 %v587, 1.0
      %v639 = vadd.f32 %v589, 1.0
      %v640 = vadd.f32 %v591, 1.0
      %v641 = vadd.f32 %v593, 1.0
      %v642 = vadd.f32 %v595, 1.0
      %v643 = vadd.f32 %v597, 1.0
      %v644 = vadd.f32 %v599, 1.0
      %v645 = vadd.f32 %v601, 1.0
      %v646 = vadd.f32 %v603, 1.0
      %v647 = vadd.f32 %v605, 1.0
      %v648 = vadd.f32 %v607, 1.0
      %v649 = vadd.f32 %v609, 1.0
      %v650 = vadd.f32 %v611, 1.0
      %v651 = vadd.f32 %v613, 1.0
      %v652 = vadd.f32 %v615, 1.0
      %v653 = vadd.f32 %v617, 1.0
      %v654 = vadd.f32 %v619, 1.0
      %v655 = vadd.f32 %v621, 1.0
      %v656 = vadd.f32 %v623, 1.0
      %v657 = vadd.f32 %v625, 1.0
      %v658 = vadd.f32 %v627, 1.0
      %v659 = vadd.f32 %v629, 1.0
      %v660 = vrcp.pop %v630
      %v661 = vmul.f32 1.0, %v660
      %v662 = vrcp.pop %v631
      %v663 = vmul.f32 1.0, %v662
      %v664 = vrcp.pop %v632
      %v665 = vmul.f32 1.0, %v664
      %v666 = vrcp.pop %v633
      %v667 = vmul.f32 1.0, %v666
      %v668 = vrcp.pop %v634
      %v669 = vmul.f32 1.0, %v668
      %v670 = vrcp.pop %v635
      %v671 = vmul.f32 1.0, %v670
      %v672 = vrcp.pop %v636
      %v673 = vmul.f32 1.0, %v672
      %v674 = vrcp.pop %v637
      %v675 = vmul.f32 1.0, %v674
      %v676 = vrcp.pop %v638
      %v677 = vmul.f32 1.0, %v676
      %v678 = vrcp.pop %v639
      %v679 = vmul.f32 1.0, %v678
      %v680 = vrcp.pop %v640
      %v681 = vmul.f32 1.0, %v680
      %v682 = vrcp.pop %v641
      %v683 = vmul.f32 1.0, %v682
      %v684 = vrcp.pop %v642
      %v685 = vmul.f32 1.0, %v684
      %v686 = vrcp.pop %v643
      %v687 = vmul.f32 1.0, %v686
      %v688 = vrcp.pop %v644
      %v689 = vmul.f32 1.0, %v688
      %v690 = vrcp.pop %v645
      %v691 = vmul.f32 1.0, %v690
      %v692 = vrcp.pop %v646
      %v693 = vmul.f32 1.0, %v692
      %v694 = vrcp.pop %v647
      %v695 = vmul.f32 1.0, %v694
      %v696 = vrcp.pop %v648
      %v697 = vmul.f32 1.0, %v696
      %v698 = vrcp.pop %v649
      %v699 = vmul.f32 1.0, %v698
      %v700 = vrcp.pop %v650
      %v701 = vmul.f32 1.0, %v700
      %v702 = vrcp.pop %v651
      %v703 = vmul.f32 1.0, %v702
      %v704 = vrcp.pop %v652
      %v705 = vmul.f32 1.0, %v704
      %v706 = vrcp.pop %v653
      %v707 = vmul.f32 1.0, %v706
      %v708 = vrcp.pop %v654
      %v709 = vmul.f32 1.0, %v708
      %v710 = vrcp.pop %v655
      %v711 = vmul.f32 1.0, %v710
      %v712 = vrcp.pop %v656
      %v713 = vmul.f32 1.0, %v712
      %v714 = vrcp.pop %v657
      %v715 = vmul.f32 1.0, %v714
      %v716 = vrcp.pop %v658
      %v717 = vmul.f32 1.0, %v716
      %v718 = vrcp.pop %v659
      %v719 = vmul.f32 1.0, %v718
      %v720 = vmul.f32 %v510, %v661
      %v721 = vmul.f32 %v511, %v663
      %v722 = vmul.f32 %v512, %v665
      %v723 = vmul.f32 %v513, %v667
      %v724 = vmul.f32 %v514, %v669
      %v725 = vmul.f32 %v515, %v671
      %v726 = vmul.f32 %v516, %v673
      %v727 = vmul.f32 %v517, %v675
      %v728 = vmul.f32 %v518, %v677
      %v729 = vmul.f32 %v519, %v679
      %v730 = vmul.f32 %v520, %v681
      %v731 = vmul.f32 %v521, %v683
      %v732 = vmul.f32 %v522, %v685
      %v733 = vmul.f32 %v523, %v687
      %v734 = vmul.f32 %v524, %v689
      %v735 = vmul.f32 %v525, %v691
      %v736 = vmul.f32 %v526, %v693
      %v737 = vmul.f32 %v527, %v695
      %v738 = vmul.f32 %v528, %v697
      %v739 = vmul.f32 %v529, %v699
      %v740 = vmul.f32 %v530, %v701
      %v741 = vmul.f32 %v531, %v703
      %v742 = vmul.f32 %v532, %v705
      %v743 = vmul.f32 %v533, %v707
      %v744 = vmul.f32 %v534, %v709
      %v745 = vmul.f32 %v535, %v711
      %v746 = vmul.f32 %v536, %v713
      %v747 = vmul.f32 %v537, %v715
      %v748 = vmul.f32 %v538, %v717
      %v749 = vmul.f32 %v539, %v719
      %v750 = vpack.c.bf16 %v721, %v720
      %v751 = vpack.c.bf16 %v722, %v722
      %v752 = vpack.c.bf16 %v724, %v723
      %v753 = vpack.c.bf16 %v725, %v725
      %v754 = vpack.c.bf16 %v727, %v726
      %v755 = vpack.c.bf16 %v728, %v728
      %v756 = vpack.c.bf16 %v730, %v729
      %v757 = vpack.c.bf16 %v731, %v731
      %v758 = vpack.c.bf16 %v733, %v732
      %v759 = vpack.c.bf16 %v734, %v734
      %v760 = vpack.c.bf16 %v736, %v735
      %v761 = vpack.c.bf16 %v737, %v737
      %v762 = vpack.c.bf16 %v739, %v738
      %v763 = vpack.c.bf16 %v740, %v740
      %v764 = vpack.c.bf16 %v742, %v741
      %v765 = vpack.c.bf16 %v743, %v743
      %v766 = vpack.c.bf16 %v745, %v744
      %v767 = vpack.c.bf16 %v746, %v746
      %v768 = vpack.c.bf16 %v748, %v747
      %v769 = vpack.c.bf16 %v749, %v749
      %vm770 = vsmask.f32 7424
      %v772 = vshrl.u32 %v750, 16
      %v774 = vshll.u32 %v750, 16
      %v776 = vrot.slane %v774, 1
      %v777 = vor.u32 %v772, %v776
      %v779 = vshll.u32 %v751, 16
      %v781 = vrot.slane %v779, 1
      %v782 = vsel %vm770, %v777, %v781
      %v784 = vshrl.u32 %v752, 16
      %v786 = vshll.u32 %v752, 16
      %v788 = vrot.slane %v786, 1
      %v789 = vor.u32 %v784, %v788
      %v791 = vshll.u32 %v753, 16
      %v793 = vrot.slane %v791, 1
      %v794 = vsel %vm770, %v789, %v793
      %v796 = vshrl.u32 %v754, 16
      %v798 = vshll.u32 %v754, 16
      %v800 = vrot.slane %v798, 1
      %v801 = vor.u32 %v796, %v800
      %v803 = vshll.u32 %v755, 16
      %v805 = vrot.slane %v803, 1
      %v806 = vsel %vm770, %v801, %v805
      %v808 = vshrl.u32 %v756, 16
      %v810 = vshll.u32 %v756, 16
      %v812 = vrot.slane %v810, 1
      %v813 = vor.u32 %v808, %v812
      %v815 = vshll.u32 %v757, 16
      %v817 = vrot.slane %v815, 1
      %v818 = vsel %vm770, %v813, %v817
      %v820 = vshrl.u32 %v758, 16
      %v822 = vshll.u32 %v758, 16
      %v824 = vrot.slane %v822, 1
      %v825 = vor.u32 %v820, %v824
      %v827 = vshll.u32 %v759, 16
      %v829 = vrot.slane %v827, 1
      %v830 = vsel %vm770, %v825, %v829
      %v832 = vshrl.u32 %v760, 16
      %v834 = vshll.u32 %v760, 16
      %v836 = vrot.slane %v834, 1
      %v837 = vor.u32 %v832, %v836
      %v839 = vshll.u32 %v761, 16
      %v841 = vrot.slane %v839, 1
      %v842 = vsel %vm770, %v837, %v841
      %v844 = vshrl.u32 %v762, 16
      %v846 = vshll.u32 %v762, 16
      %v848 = vrot.slane %v846, 1
      %v849 = vor.u32 %v844, %v848
      %v851 = vshll.u32 %v763, 16
      %v853 = vrot.slane %v851, 1
      %v854 = vsel %vm770, %v849, %v853
      %v856 = vshrl.u32 %v764, 16
      %v858 = vshll.u32 %v764, 16
      %v860 = vrot.slane %v858, 1
      %v861 = vor.u32 %v856, %v860
      %v863 = vshll.u32 %v765, 16
      %v865 = vrot.slane %v863, 1
      %v866 = vsel %vm770, %v861, %v865
      %867 = vrot.lane.b32.xlu0 %v782, 16
      %v868 = vpop.permute.xlu0 %867
      %869 = vrot.lane.b32.xlu0 %v794, 16
      %v870 = vpop.permute.xlu0 %869
      %871 = vrot.lane.b32.xlu0 %v806, 16
      %v872 = vpop.permute.xlu0 %871
      %873 = vrot.lane.b32.xlu0 %v818, 16
      %v874 = vpop.permute.xlu0 %873
      %875 = vrot.lane.b32.xlu0 %v830, 16
      %v876 = vpop.permute.xlu0 %875
      %877 = vrot.lane.b32.xlu0 %v842, 16
      %v878 = vpop.permute.xlu0 %877
      %879 = vrot.lane.b32.xlu0 %v854, 16
      %v880 = vpop.permute.xlu0 %879
      %881 = vrot.lane.b32.xlu0 %v866, 16
      %v882 = vpop.permute.xlu0 %881
      %vm899 = vcmask 1046528
      %v900 = vrot.slane %v750, 1
      %v901 = vrot.slane %v751, 1
      %v902 = vsel %vm899, %v900, %v901
      %v903 = vrot.slane %v752, 1
      %v904 = vrot.slane %v753, 1
      %v905 = vsel %vm899, %v903, %v904
      %v906 = vrot.slane %v754, 1
      %v907 = vrot.slane %v755, 1
      %v908 = vsel %vm899, %v906, %v907
      %v909 = vrot.slane %v756, 1
      %v910 = vrot.slane %v757, 1
      %v911 = vsel %vm899, %v909, %v910
      %v912 = vrot.slane %v758, 1
      %v913 = vrot.slane %v759, 1
      %v914 = vsel %vm899, %v912, %v913
      %v915 = vrot.slane %v760, 1
      %v916 = vrot.slane %v761, 1
      %v917 = vsel %vm899, %v915, %v916
      %v918 = vrot.slane %v762, 1
      %v919 = vrot.slane %v763, 1
      %v920 = vsel %vm899, %v918, %v919
      %v921 = vrot.slane %v764, 1
      %v922 = vrot.slane %v765, 1
      %v923 = vsel %vm899, %v921, %v922
      %924 = vrot.lane.b32.xlu0 %v902, 32
      %v925 = vpop.permute.xlu0 %924
      %926 = vrot.lane.b32.xlu0 %v905, 32
      %v927 = vpop.permute.xlu0 %926
      %928 = vrot.lane.b32.xlu0 %v908, 32
      %v929 = vpop.permute.xlu0 %928
      %930 = vrot.lane.b32.xlu0 %v911, 32
      %v931 = vpop.permute.xlu0 %930
      %932 = vrot.lane.b32.xlu0 %v914, 32
      %v933 = vpop.permute.xlu0 %932
      %934 = vrot.lane.b32.xlu0 %v917, 32
      %v935 = vpop.permute.xlu0 %934
      %936 = vrot.lane.b32.xlu0 %v920, 32
      %v937 = vpop.permute.xlu0 %936
      %938 = vrot.lane.b32.xlu0 %v923, 32
      %v939 = vpop.permute.xlu0 %938
      %vm940 = vcmask 130048
      %v942 = vsel %vm940, %v750, %v868
      %v944 = vsel %vm940, %v752, %v870
      %v946 = vsel %vm940, %v754, %v872
      %v948 = vsel %vm940, %v756, %v874
      %v950 = vsel %vm940, %v758, %v876
      %v952 = vsel %vm940, %v760, %v878
      %v954 = vsel %vm940, %v762, %v880
      %v956 = vsel %vm940, %v764, %v882
      %vm957 = vcmask 261120
      %v959 = vsel %vm957, %v942, %v925
      %v961 = vsel %vm957, %v944, %v927
      %v963 = vsel %vm957, %v946, %v929
      %v965 = vsel %vm957, %v948, %v931
      %v967 = vsel %vm957, %v950, %v933
      %v969 = vsel %vm957, %v952, %v935
      %v971 = vsel %vm957, %v954, %v937
      %v973 = vsel %vm957, %v956, %v939
      %v974 = vld [vmem:[%s3] sm:$0xf]
      %v975 = vld [vmem:[%s3 + $0x4] sm:$0xf]
      %v976 = vld [vmem:[%s3 + $0x8] sm:$0xf]
      %v977 = vld [vmem:[%s3 + $0xc] sm:$0xf]
      %v978 = vld [vmem:[%s3 + $0x10] sm:$0xf]
      %v979 = vld [vmem:[%s3 + $0x14] sm:$0xf]
      %v981 = vshrl.u32 %v766, 16
      %v983 = vshll.u32 %v766, 16
      %v985 = vrot.slane %v983, 1
      %v986 = vor.u32 %v981, %v985
      %v988 = vshll.u32 %v767, 16
      %v990 = vrot.slane %v988, 1
      %v991 = vsel %vm770, %v986, %v990
      %992 = vrot.lane.b32.xlu0 %v991, 16
      %v993 = vpop.permute.xlu0 %992
      %v996 = vrot.slane %v766, 1
      %v997 = vrot.slane %v767, 1
      %v998 = vsel %vm899, %v996, %v997
      %999 = vrot.lane.b32.xlu0 %v998, 32
      %v1000 = vpop.permute.xlu0 %999
      %v1002 = vsel %vm940, %v766, %v993
      %v1004 = vsel %vm957, %v1002, %v1000
      %s1005 = scalar_lea.vmem %s3, 24
      %v1006 = vld [vmem:[%s1005] sm:$0xf]
      %v1007 = vld [vmem:[%s1005 + $0x4] sm:$0xf]
      %v1008 = vld [vmem:[%s1005 + $0x8] sm:$0xf]
      %v1009 = vld [vmem:[%s1005 + $0xc] sm:$0xf]
      %v1010 = vld [vmem:[%s1005 + $0x10] sm:$0xf]
      %v1011 = vld [vmem:[%s1005 + $0x14] sm:$0xf]
      %v1018 = vunpack.c.l.b16 %v1006
      %v1019 = vunpack.c.l.b16 %v1007
      %v1020 = vunpack.c.l.b16 %v1008
      %v1021 = vunpack.c.l.b16 %v1009
      %v1022 = vunpack.c.l.b16 %v1010
      %v1023 = vunpack.c.l.b16 %v1011
      %v1024 = vpack.c.b16 %v1019, %v1018
      %v1025 = vpack.c.b16 %v1021, %v1020
      %v1026 = vpack.c.b16 %v1023, %v1022
      %vm1030 = vcmask 392192
      %v1031 = vsel %vm1030, %v961, 0
      %v1033 = vsel %vm1030, %v963, 0
      %v1035 = vsel %vm1030, %v965, 0
      %v1037 = vsel %vm1030, %v967, 0
      %v1039 = vsel %vm1030, %v969, 0
      %v1041 = vsel %vm1030, %v971, 0
      %v1043 = vsel %vm1030, %v973, 0
      %v1045 = vsel %vm1030, %v1004, 0
      %1047 = vmatprep.subr.bf16.mxu0 0
      %1048 = vmatpush1.bf16.msra.mxu0 0
      %1049 = vmatprep.subr.bf16.mxu0 0
      %1050 = vmatpush1.bf16.msra.mxu0 0
      %1051 = vmatprep.subr.bf16.mxu0 0
      %1052 = vmatpush1.bf16.msra.mxu0 0
      %1053 = vmatprep.subr.bf16.mxu0 0
      %1054 = vmatpush1.bf16.msra.mxu0 0
      %1055 = vmatprep.subr.bf16.mxu0 0
      %1056 = vmatpush1.bf16.msra.mxu0 0
      %1057 = vmatprep.subr.bf16.mxu0 0
      %1058 = vmatpush1.bf16.msra.mxu0 %v1026
      %1059 = vmatprep.subr.bf16.mxu0 0
      %1060 = vmatpush1.bf16.msra.mxu0 %v1025
      %1061 = vmatprep.subr.bf16.mxu0 0
      %1062 = vmatpush1.bf16.msra.mxu0 %v1024
      %1063 = vmatprep.subr.bf16.mxu0 0
      %1064 = vmatpush2.bf16.msra.mxu0 0
      %1065 = vmatprep.subr.bf16.mxu0 0
      %1066 = vmatpush2.bf16.msra.mxu0 0
      %1067 = vmatprep.subr.bf16.mxu0 0
      %1068 = vmatpush2.bf16.msra.mxu0 0
      %1069 = vmatprep.subr.bf16.mxu0 0
      %1070 = vmatpush2.bf16.msra.mxu0 0
      %1071 = vmatprep.subr.bf16.mxu0 0
      %1072 = vmatpush2.bf16.msra.mxu0 0
      %1073 = vmatprep.subr.bf16.mxu0 0
      %1074 = vmatpush2.bf16.msra.mxu0 0
      %1075 = vmatprep.subr.bf16.mxu0 0
      %1076 = vmatpush2.bf16.msra.mxu0 0
      %1077 = vmatprep.subr.bf16.mxu0 0
      %1078 = vmatpush2.bf16.msra.mxu0 0
      %1079 = vmatprep.mubr.bf16.mxu0 0
      %1080 = vmatmul.mubr.bf16.gmra.mxu0 %v1031
      %v1081 = vpop.f32.mrf.mxu0
      %v1082 = vadd.f32 0.0, %v1081
      %v1083 = vpop.f32.mrf.mxu0
      %v1084 = vpop.f32.mrf.mxu0
      %v1085 = vadd.f32 0.0, %v1084
      %v1086 = vpop.f32.mrf.mxu0
      %1087 = vmatprep.mubr.bf16.mxu0 0
      %1088 = vmatmul.mubr.bf16.gmra.mxu0 %v1033
      %v1089 = vpop.f32.mrf.mxu0
      %v1090 = vadd.f32 0.0, %v1089
      %v1091 = vpop.f32.mrf.mxu0
      %v1092 = vpop.f32.mrf.mxu0
      %v1093 = vadd.f32 0.0, %v1092
      %v1094 = vpop.f32.mrf.mxu0
      %1095 = vmatprep.mubr.bf16.mxu0 0
      %1096 = vmatmul.mubr.bf16.gmra.mxu0 %v1035
      %v1097 = vpop.f32.mrf.mxu0
      %v1098 = vadd.f32 0.0, %v1097
      %v1099 = vpop.f32.mrf.mxu0
      %v1100 = vpop.f32.mrf.mxu0
      %v1101 = vadd.f32 0.0, %v1100
      %v1102 = vpop.f32.mrf.mxu0
      %1103 = vmatprep.mubr.bf16.mxu0 0
      %1104 = vmatmul.mubr.bf16.gmra.mxu0 %v1037
      %v1105 = vpop.f32.mrf.mxu0
      %v1106 = vadd.f32 0.0, %v1105
      %v1107 = vpop.f32.mrf.mxu0
      %v1108 = vpop.f32.mrf.mxu0
      %v1109 = vadd.f32 0.0, %v1108
      %v1110 = vpop.f32.mrf.mxu0
      %1111 = vmatprep.mubr.bf16.mxu0 0
      %1112 = vmatmul.mubr.bf16.gmra.mxu0 %v1039
      %v1113 = vpop.f32.mrf.mxu0
      %v1114 = vadd.f32 0.0, %v1113
      %v1115 = vpop.f32.mrf.mxu0
      %v1116 = vpop.f32.mrf.mxu0
      %v1117 = vadd.f32 0.0, %v1116
      %v1118 = vpop.f32.mrf.mxu0
      %1119 = vmatprep.mubr.bf16.mxu0 0
      %1120 = vmatmul.mubr.bf16.gmra.mxu0 %v1041
      %v1121 = vpop.f32.mrf.mxu0
      %v1122 = vadd.f32 0.0, %v1121
      %v1123 = vpop.f32.mrf.mxu0
      %v1124 = vpop.f32.mrf.mxu0
      %v1125 = vadd.f32 0.0, %v1124
      %v1126 = vpop.f32.mrf.mxu0
      %1127 = vmatprep.mubr.bf16.mxu0 0
      %1128 = vmatmul.mubr.bf16.gmra.mxu0 %v1043
      %v1129 = vpop.f32.mrf.mxu0
      %v1130 = vadd.f32 0.0, %v1129
      %v1131 = vpop.f32.mrf.mxu0
      %v1132 = vpop.f32.mrf.mxu0
      %v1133 = vadd.f32 0.0, %v1132
      %v1134 = vpop.f32.mrf.mxu0
      %1135 = vmatprep.mubr.bf16.mxu0 0
      %1136 = vmatmul.mubr.bf16.gmra.mxu0 %v1045
      %v1137 = vpop.f32.mrf.mxu0
      %v1138 = vadd.f32 0.0, %v1137
      %v1139 = vpop.f32.mrf.mxu0
      %v1140 = vpop.f32.mrf.mxu0
      %v1141 = vadd.f32 0.0, %v1140
      %v1142 = vpop.f32.mrf.mxu0
      %1143 = vdwg.mxu0
      %v1150 = vunpack.c.l.b16 %v974
      %v1151 = vunpack.c.l.b16 %v975
      %v1152 = vunpack.c.l.b16 %v976
      %v1153 = vunpack.c.l.b16 %v977
      %v1154 = vunpack.c.l.b16 %v978
      %v1155 = vunpack.c.l.b16 %v979
      %v1156 = vpack.c.b16 %v1151, %v1150
      %v1157 = vpack.c.b16 %v1153, %v1152
      %v1158 = vpack.c.b16 %v1155, %v1154
      %v1162 = vsel %vm1030, %v959, 0
      %1164 = vmatprep.subr.bf16.mxu0 0
      %1165 = vmatpush1.bf16.msra.mxu0 0
      %1166 = vmatprep.subr.bf16.mxu0 0
      %1167 = vmatpush1.bf16.msra.mxu0 0
      %1168 = vmatprep.subr.bf16.mxu0 0
      %1169 = vmatpush1.bf16.msra.mxu0 0
      %1170 = vmatprep.subr.bf16.mxu0 0
      %1171 = vmatpush1.bf16.msra.mxu0 0
      %1172 = vmatprep.subr.bf16.mxu0 0
      %1173 = vmatpush1.bf16.msra.mxu0 0
      %1174 = vmatprep.subr.bf16.mxu0 0
      %1175 = vmatpush1.bf16.msra.mxu0 %v1158
      %1176 = vmatprep.subr.bf16.mxu0 0
      %1177 = vmatpush1.bf16.msra.mxu0 %v1157
      %1178 = vmatprep.subr.bf16.mxu0 0
      %1179 = vmatpush1.bf16.msra.mxu0 %v1156
      %1180 = vmatprep.subr.bf16.mxu0 0
      %1181 = vmatpush2.bf16.msra.mxu0 0
      %1182 = vmatprep.subr.bf16.mxu0 0
      %1183 = vmatpush2.bf16.msra.mxu0 0
      %1184 = vmatprep.subr.bf16.mxu0 0
      %1185 = vmatpush2.bf16.msra.mxu0 0
      %1186 = vmatprep.subr.bf16.mxu0 0
      %1187 = vmatpush2.bf16.msra.mxu0 0
      %1188 = vmatprep.subr.bf16.mxu0 0
      %1189 = vmatpush2.bf16.msra.mxu0 0
      %1190 = vmatprep.subr.bf16.mxu0 0
      %1191 = vmatpush2.bf16.msra.mxu0 0
      %1192 = vmatprep.subr.bf16.mxu0 0
      %1193 = vmatpush2.bf16.msra.mxu0 0
      %1194 = vmatprep.subr.bf16.mxu0 0
      %1195 = vmatpush2.bf16.msra.mxu0 0
      %1196 = vmatprep.mubr.bf16.mxu0 0
      %1197 = vmatmul.mubr.bf16.gmra.mxu0 %v1162
      %v1198 = vpop.f32.mrf.mxu0
      %v1199 = vadd.f32 %v1082, %v1198
      %v1200 = vpop.f32.mrf.mxu0
      %v1201 = vpop.f32.mrf.mxu0
      %v1202 = vadd.f32 %v1085, %v1201
      %v1203 = vpop.f32.mrf.mxu0
      %1204 = vmatprep.mubr.bf16.mxu0 0
      %1205 = vmatmul.mubr.bf16.gmra.mxu0 %v1031
      %v1206 = vpop.f32.mrf.mxu0
      %v1207 = vadd.f32 %v1090, %v1206
      %v1208 = vpop.f32.mrf.mxu0
      %v1209 = vpop.f32.mrf.mxu0
      %v1210 = vadd.f32 %v1093, %v1209
      %v1211 = vpop.f32.mrf.mxu0
      %1212 = vmatprep.mubr.bf16.mxu0 0
      %1213 = vmatmul.mubr.bf16.gmra.mxu0 %v1033
      %v1214 = vpop.f32.mrf.mxu0
      %v1215 = vadd.f32 %v1098, %v1214
      %v1216 = vpop.f32.mrf.mxu0
      %v1217 = vpop.f32.mrf.mxu0
      %v1218 = vadd.f32 %v1101, %v1217
      %v1219 = vpop.f32.mrf.mxu0
      %1220 = vmatprep.mubr.bf16.mxu0 0
      %1221 = vmatmul.mubr.bf16.gmra.mxu0 %v1035
      %v1222 = vpop.f32.mrf.mxu0
      %v1223 = vadd.f32 %v1106, %v1222
      %v1224 = vpop.f32.mrf.mxu0
      %v1225 = vpop.f32.mrf.mxu0
      %v1226 = vadd.f32 %v1109, %v1225
      %v1227 = vpop.f32.mrf.mxu0
      %1228 = vmatprep.mubr.bf16.mxu0 0
      %1229 = vmatmul.mubr.bf16.gmra.mxu0 %v1037
      %v1230 = vpop.f32.mrf.mxu0
      %v1231 = vadd.f32 %v1114, %v1230
      %v1232 = vpop.f32.mrf.mxu0
      %v1233 = vpop.f32.mrf.mxu0
      %v1234 = vadd.f32 %v1117, %v1233
      %v1235 = vpop.f32.mrf.mxu0
      %1236 = vmatprep.mubr.bf16.mxu0 0
      %1237 = vmatmul.mubr.bf16.gmra.mxu0 %v1039
      %v1238 = vpop.f32.mrf.mxu0
      %v1239 = vadd.f32 %v1122, %v1238
      %v1240 = vpop.f32.mrf.mxu0
      %v1241 = vpop.f32.mrf.mxu0
      %v1242 = vadd.f32 %v1125, %v1241
      %v1243 = vpop.f32.mrf.mxu0
      %1244 = vmatprep.mubr.bf16.mxu0 0
      %1245 = vmatmul.mubr.bf16.gmra.mxu0 %v1041
      %v1246 = vpop.f32.mrf.mxu0
      %v1247 = vadd.f32 %v1130, %v1246
      %v1248 = vpop.f32.mrf.mxu0
      %v1249 = vpop.f32.mrf.mxu0
      %v1250 = vadd.f32 %v1133, %v1249
      %v1251 = vpop.f32.mrf.mxu0
      %1252 = vmatprep.mubr.bf16.mxu0 0
      %1253 = vmatmul.mubr.bf16.gmra.mxu0 %v1043
      %v1254 = vpop.f32.mrf.mxu0
      %v1255 = vadd.f32 %v1138, %v1254
      %v1256 = vpop.f32.mrf.mxu0
      %v1257 = vpop.f32.mrf.mxu0
      %v1258 = vadd.f32 %v1141, %v1257
      %v1259 = vpop.f32.mrf.mxu0
      %1260 = vdwg.mxu0
      %v1262 = vshrl.u32 %v768, 16
      %v1264 = vshll.u32 %v768, 16
      %v1266 = vrot.slane %v1264, 1
      %v1267 = vor.u32 %v1262, %v1266
      %v1269 = vshll.u32 %v769, 16
      %v1271 = vrot.slane %v1269, 1
      %v1272 = vsel %vm770, %v1267, %v1271
      %1273 = vrot.lane.b32.xlu0 %v1272, 16
      %v1274 = vpop.permute.xlu0 %1273
      %v1277 = vrot.slane %v768, 1
      %v1278 = vrot.slane %v769, 1
      %v1279 = vsel %vm899, %v1277, %v1278
      %1280 = vrot.lane.b32.xlu0 %v1279, 32
      %v1281 = vpop.permute.xlu0 %1280
      %v1283 = vsel %vm940, %v768, %v1274
      %v1285 = vsel %vm957, %v1283, %v1281
      %s1286 = scalar_lea.vmem %s3, 48
      %v1287 = vld [vmem:[%s1286] sm:$0xf]
      %v1288 = vld [vmem:[%s1286 + $0x4] sm:$0xf]
      %v1289 = vld [vmem:[%s1286 + $0x8] sm:$0xf]
      %v1290 = vld [vmem:[%s1286 + $0xc] sm:$0xf]
      %v1291 = vld [vmem:[%s1286 + $0x10] sm:$0xf]
      %v1292 = vld [vmem:[%s1286 + $0x14] sm:$0xf]
      %v1299 = vunpack.c.l.b16 %v1287
      %v1300 = vunpack.c.l.b16 %v1288
      %v1301 = vunpack.c.l.b16 %v1289
      %v1302 = vunpack.c.l.b16 %v1290
      %v1303 = vunpack.c.l.b16 %v1291
      %v1304 = vunpack.c.l.b16 %v1292
      %v1305 = vpack.c.b16 %v1300, %v1299
      %v1306 = vpack.c.b16 %v1302, %v1301
      %v1307 = vpack.c.b16 %v1304, %v1303
      %v1311 = vsel %vm1030, %v1285, 0
      %1313 = vmatprep.subr.bf16.mxu0 0
      %1314 = vmatpush1.bf16.msra.mxu0 0
      %1315 = vmatprep.subr.bf16.mxu0 0
      %1316 = vmatpush1.bf16.msra.mxu0 0
      %1317 = vmatprep.subr.bf16.mxu0 0
      %1318 = vmatpush1.bf16.msra.mxu0 0
      %1319 = vmatprep.subr.bf16.mxu0 0
      %1320 = vmatpush1.bf16.msra.mxu0 0
      %1321 = vmatprep.subr.bf16.mxu0 0
      %1322 = vmatpush1.bf16.msra.mxu0 0
      %1323 = vmatprep.subr.bf16.mxu0 0
      %1324 = vmatpush1.bf16.msra.mxu0 %v1307
      %1325 = vmatprep.subr.bf16.mxu0 0
      %1326 = vmatpush1.bf16.msra.mxu0 %v1306
      %1327 = vmatprep.subr.bf16.mxu0 0
      %1328 = vmatpush1.bf16.msra.mxu0 %v1305
      %1329 = vmatprep.subr.bf16.mxu0 0
      %1330 = vmatpush2.bf16.msra.mxu0 0
      %1331 = vmatprep.subr.bf16.mxu0 0
      %1332 = vmatpush2.bf16.msra.mxu0 0
      %1333 = vmatprep.subr.bf16.mxu0 0
      %1334 = vmatpush2.bf16.msra.mxu0 0
      %1335 = vmatprep.subr.bf16.mxu0 0
      %1336 = vmatpush2.bf16.msra.mxu0 0
      %1337 = vmatprep.subr.bf16.mxu0 0
      %1338 = vmatpush2.bf16.msra.mxu0 0
      %1339 = vmatprep.subr.bf16.mxu0 0
      %1340 = vmatpush2.bf16.msra.mxu0 0
      %1341 = vmatprep.subr.bf16.mxu0 0
      %1342 = vmatpush2.bf16.msra.mxu0 0
      %1343 = vmatprep.subr.bf16.mxu0 0
      %1344 = vmatpush2.bf16.msra.mxu0 0
      %1345 = vmatprep.mubr.bf16.mxu0 0
      %1346 = vmatmul.mubr.bf16.gmra.mxu0 %v1033
      %v1347 = vpop.f32.mrf.mxu0
      %v1348 = vadd.f32 0.0, %v1347
      %v1349 = vpop.f32.mrf.mxu0
      %v1350 = vpop.f32.mrf.mxu0
      %v1351 = vadd.f32 0.0, %v1350
      %v1352 = vpop.f32.mrf.mxu0
      %1353 = vmatprep.mubr.bf16.mxu0 0
      %1354 = vmatmul.mubr.bf16.gmra.mxu0 %v1035
      %v1355 = vpop.f32.mrf.mxu0
      %v1356 = vadd.f32 0.0, %v1355
      %v1357 = vpop.f32.mrf.mxu0
      %v1358 = vpop.f32.mrf.mxu0
      %v1359 = vadd.f32 0.0, %v1358
      %v1360 = vpop.f32.mrf.mxu0
      %1361 = vmatprep.mubr.bf16.mxu0 0
      %1362 = vmatmul.mubr.bf16.gmra.mxu0 %v1037
      %v1363 = vpop.f32.mrf.mxu0
      %v1364 = vadd.f32 0.0, %v1363
      %v1365 = vpop.f32.mrf.mxu0
      %v1366 = vpop.f32.mrf.mxu0
      %v1367 = vadd.f32 0.0, %v1366
      %v1368 = vpop.f32.mrf.mxu0
      %1369 = vmatprep.mubr.bf16.mxu0 0
      %1370 = vmatmul.mubr.bf16.gmra.mxu0 %v1039
      %v1371 = vpop.f32.mrf.mxu0
      %v1372 = vadd.f32 0.0, %v1371
      %v1373 = vpop.f32.mrf.mxu0
      %v1374 = vpop.f32.mrf.mxu0
      %v1375 = vadd.f32 0.0, %v1374
      %v1376 = vpop.f32.mrf.mxu0
      %1377 = vmatprep.mubr.bf16.mxu0 0
      %1378 = vmatmul.mubr.bf16.gmra.mxu0 %v1041
      %v1379 = vpop.f32.mrf.mxu0
      %v1380 = vadd.f32 0.0, %v1379
      %v1381 = vpop.f32.mrf.mxu0
      %v1382 = vpop.f32.mrf.mxu0
      %v1383 = vadd.f32 0.0, %v1382
      %v1384 = vpop.f32.mrf.mxu0
      %1385 = vmatprep.mubr.bf16.mxu0 0
      %1386 = vmatmul.mubr.bf16.gmra.mxu0 %v1043
      %v1387 = vpop.f32.mrf.mxu0
      %v1388 = vadd.f32 0.0, %v1387
      %v1389 = vpop.f32.mrf.mxu0
      %v1390 = vpop.f32.mrf.mxu0
      %v1391 = vadd.f32 0.0, %v1390
      %v1392 = vpop.f32.mrf.mxu0
      %1393 = vmatprep.mubr.bf16.mxu0 0
      %1394 = vmatmul.mubr.bf16.gmra.mxu0 %v1045
      %v1395 = vpop.f32.mrf.mxu0
      %v1396 = vadd.f32 0.0, %v1395
      %v1397 = vpop.f32.mrf.mxu0
      %v1398 = vpop.f32.mrf.mxu0
      %v1399 = vadd.f32 0.0, %v1398
      %v1400 = vpop.f32.mrf.mxu0
      %1401 = vmatprep.mubr.bf16.mxu0 0
      %1402 = vmatmul.mubr.bf16.gmra.mxu0 %v1311
      %v1403 = vpop.f32.mrf.mxu0
      %v1404 = vadd.f32 0.0, %v1403
      %v1405 = vpop.f32.mrf.mxu0
      %v1406 = vpop.f32.mrf.mxu0
      %v1407 = vadd.f32 0.0, %v1406
      %v1408 = vpop.f32.mrf.mxu0
      %1409 = vdwg.mxu0
      %v1410 = vadd.f32 %v1199, %v1348
      %v1411 = vadd.f32 %v1202, %v1351
      %v1412 = vadd.f32 %v1207, %v1356
      %v1413 = vadd.f32 %v1210, %v1359
      %v1414 = vadd.f32 %v1215, %v1364
      %v1415 = vadd.f32 %v1218, %v1367
      %v1416 = vadd.f32 %v1223, %v1372
      %v1417 = vadd.f32 %v1226, %v1375
      %v1418 = vadd.f32 %v1231, %v1380
      %v1419 = vadd.f32 %v1234, %v1383
      %v1420 = vadd.f32 %v1239, %v1388
      %v1421 = vadd.f32 %v1242, %v1391
      %v1422 = vadd.f32 %v1247, %v1396
      %v1423 = vadd.f32 %v1250, %v1399
      %v1424 = vadd.f32 %v1255, %v1404
      %v1425 = vadd.f32 %v1258, %v1407
      %v1426 = vld [vmem:[%s4] sm:$0x1]
      %v1428 = vlaneseq
      %v1429 = vshrl.u32 %v1428, 7
      %v1430 = vsub.s32 0, %v1429
      %v1431 = vrot.slane %v1426, %v1430
      %v1433 = vadd.f32 %v1410, %v1431
      %v1434 = vadd.f32 %v1411, %v1431
      %v1435 = vadd.f32 %v1412, %v1431
      %v1436 = vadd.f32 %v1413, %v1431
      %v1437 = vadd.f32 %v1414, %v1431
      %v1438 = vadd.f32 %v1415, %v1431
      %v1439 = vadd.f32 %v1416, %v1431
      %v1440 = vadd.f32 %v1417, %v1431
      %v1441 = vadd.f32 %v1418, %v1431
      %v1442 = vadd.f32 %v1419, %v1431
      %v1443 = vadd.f32 %v1420, %v1431
      %v1444 = vadd.f32 %v1421, %v1431
      %v1445 = vadd.f32 %v1422, %v1431
      %v1446 = vadd.f32 %v1423, %v1431
      %v1447 = vadd.f32 %v1424, %v1431
      %v1448 = vadd.f32 %v1425, %v1431
      %v1449 = vld [vmem:[%s464] sm:$0x1]
      %v1451 = vlaneseq
      %v1452 = vshrl.u32 %v1451, 7
      %v1453 = vsub.s32 0, %v1452
      %v1454 = vrot.slane %v1449, %v1453
      %v1456 = vmul.f32 %v1433, %v1454
      %v1457 = vmul.f32 %v1434, %v1454
      %v1458 = vmul.f32 %v1435, %v1454
      %v1459 = vmul.f32 %v1436, %v1454
      %v1460 = vmul.f32 %v1437, %v1454
      %v1461 = vmul.f32 %v1438, %v1454
      %v1462 = vmul.f32 %v1439, %v1454
      %v1463 = vmul.f32 %v1440, %v1454
      %v1464 = vmul.f32 %v1441, %v1454
      %v1465 = vmul.f32 %v1442, %v1454
      %v1466 = vmul.f32 %v1443, %v1454
      %v1467 = vmul.f32 %v1444, %v1454
      %v1468 = vmul.f32 %v1445, %v1454
      %v1469 = vmul.f32 %v1446, %v1454
      %v1470 = vmul.f32 %v1447, %v1454
      %v1471 = vmul.f32 %v1448, %v1454
      %v1472 = vld [vmem:[%s467] sm:$0x1]
      %v1474 = vlaneseq
      %v1475 = vshrl.u32 %v1474, 7
      %v1476 = vsub.s32 0, %v1475
      %v1477 = vrot.slane %v1472, %v1476
      %v1479 = vadd.f32 %v1456, %v1477
      %v1480 = vadd.f32 %v1457, %v1477
      %v1481 = vadd.f32 %v1458, %v1477
      %v1482 = vadd.f32 %v1459, %v1477
      %v1483 = vadd.f32 %v1460, %v1477
      %v1484 = vadd.f32 %v1461, %v1477
      %v1485 = vadd.f32 %v1462, %v1477
      %v1486 = vadd.f32 %v1463, %v1477
      %v1487 = vadd.f32 %v1464, %v1477
      %v1488 = vadd.f32 %v1465, %v1477
      %v1489 = vadd.f32 %v1466, %v1477
      %v1490 = vadd.f32 %v1467, %v1477
      %v1491 = vadd.f32 %v1468, %v1477
      %v1492 = vadd.f32 %v1469, %v1477
      %v1493 = vadd.f32 %v1470, %v1477
      %v1494 = vadd.f32 %v1471, %v1477
      %v1495 = vxor.u32 %v1479, 2147483648
      %v1496 = vxor.u32 %v1480, 2147483648
      %v1497 = vxor.u32 %v1481, 2147483648
      %v1498 = vxor.u32 %v1482, 2147483648
      %v1499 = vxor.u32 %v1483, 2147483648
      %v1500 = vxor.u32 %v1484, 2147483648
      %v1501 = vxor.u32 %v1485, 2147483648
      %v1502 = vxor.u32 %v1486, 2147483648
      %v1503 = vxor.u32 %v1487, 2147483648
      %v1504 = vxor.u32 %v1488, 2147483648
      %v1505 = vxor.u32 %v1489, 2147483648
      %v1506 = vxor.u32 %v1490, 2147483648
      %v1507 = vxor.u32 %v1491, 2147483648
      %v1508 = vxor.u32 %v1492, 2147483648
      %v1509 = vxor.u32 %v1493, 2147483648
      %v1510 = vxor.u32 %v1494, 2147483648
      %v1511 = vmul.f32 %v1495, 1.442695
      %v1512 = vpow.pop %v1511
      %v1513 = vmul.f32 %v1496, 1.442695
      %v1514 = vpow.pop %v1513
      %v1515 = vmul.f32 %v1497, 1.442695
      %v1516 = vpow.pop %v1515
      %v1517 = vmul.f32 %v1498, 1.442695
      %v1518 = vpow.pop %v1517
      %v1519 = vmul.f32 %v1499, 1.442695
      %v1520 = vpow.pop %v1519
      %v1521 = vmul.f32 %v1500, 1.442695
      %v1522 = vpow.pop %v1521
      %v1523 = vmul.f32 %v1501, 1.442695
      %v1524 = vpow.pop %v1523
      %v1525 = vmul.f32 %v1502, 1.442695
      %v1526 = vpow.pop %v1525
      %v1527 = vmul.f32 %v1503, 1.442695
      %v1528 = vpow.pop %v1527
      %v1529 = vmul.f32 %v1504, 1.442695
      %v1530 = vpow.pop %v1529
      %v1531 = vmul.f32 %v1505, 1.442695
      %v1532 = vpow.pop %v1531
      %v1533 = vmul.f32 %v1506, 1.442695
      %v1534 = vpow.pop %v1533
      %v1535 = vmul.f32 %v1507, 1.442695
      %v1536 = vpow.pop %v1535
      %v1537 = vmul.f32 %v1508, 1.442695
      %v1538 = vpow.pop %v1537
      %v1539 = vmul.f32 %v1509, 1.442695
      %v1540 = vpow.pop %v1539
      %v1541 = vmul.f32 %v1510, 1.442695
      %v1542 = vpow.pop %v1541
      %v1543 = vadd.f32 %v1512, 1.0
      %v1544 = vadd.f32 %v1514, 1.0
      %v1545 = vadd.f32 %v1516, 1.0
      %v1546 = vadd.f32 %v1518, 1.0
      %v1547 = vadd.f32 %v1520, 1.0
      %v1548 = vadd.f32 %v1522, 1.0
      %v1549 = vadd.f32 %v1524, 1.0
      %v1550 = vadd.f32 %v1526, 1.0
      %v1551 = vadd.f32 %v1528, 1.0
      %v1552 = vadd.f32 %v1530, 1.0
      %v1553 = vadd.f32 %v1532, 1.0
      %v1554 = vadd.f32 %v1534, 1.0
      %v1555 = vadd.f32 %v1536, 1.0
      %v1556 = vadd.f32 %v1538, 1.0
      %v1557 = vadd.f32 %v1540, 1.0
      %v1558 = vadd.f32 %v1542, 1.0
      %v1559 = vrcp.pop %v1543
      %v1560 = vmul.f32 1.0, %v1559
      %v1561 = vrcp.pop %v1544
      %v1562 = vmul.f32 1.0, %v1561
      %v1563 = vrcp.pop %v1545
      %v1564 = vmul.f32 1.0, %v1563
      %v1565 = vrcp.pop %v1546
      %v1566 = vmul.f32 1.0, %v1565
      %v1567 = vrcp.pop %v1547
      %v1568 = vmul.f32 1.0, %v1567
      %v1569 = vrcp.pop %v1548
      %v1570 = vmul.f32 1.0, %v1569
      %v1571 = vrcp.pop %v1549
      %v1572 = vmul.f32 1.0, %v1571
      %v1573 = vrcp.pop %v1550
      %v1574 = vmul.f32 1.0, %v1573
      %v1575 = vrcp.pop %v1551
      %v1576 = vmul.f32 1.0, %v1575
      %v1577 = vrcp.pop %v1552
      %v1578 = vmul.f32 1.0, %v1577
      %v1579 = vrcp.pop %v1553
      %v1580 = vmul.f32 1.0, %v1579
      %v1581 = vrcp.pop %v1554
      %v1582 = vmul.f32 1.0, %v1581
      %v1583 = vrcp.pop %v1555
      %v1584 = vmul.f32 1.0, %v1583
      %v1585 = vrcp.pop %v1556
      %v1586 = vmul.f32 1.0, %v1585
      %v1587 = vrcp.pop %v1557
      %v1588 = vmul.f32 1.0, %v1587
      %v1589 = vrcp.pop %v1558
      %v1590 = vmul.f32 1.0, %v1589
      %v1591 = vmul.f32 %v1479, %v1560
      %v1592 = vmul.f32 %v1480, %v1562
      %v1593 = vmul.f32 %v1481, %v1564
      %v1594 = vmul.f32 %v1482, %v1566
      %v1595 = vmul.f32 %v1483, %v1568
      %v1596 = vmul.f32 %v1484, %v1570
      %v1597 = vmul.f32 %v1485, %v1572
      %v1598 = vmul.f32 %v1486, %v1574
      %v1599 = vmul.f32 %v1487, %v1576
      %v1600 = vmul.f32 %v1488, %v1578
      %v1601 = vmul.f32 %v1489, %v1580
      %v1602 = vmul.f32 %v1490, %v1582
      %v1603 = vmul.f32 %v1491, %v1584
      %v1604 = vmul.f32 %v1492, %v1586
      %v1605 = vmul.f32 %v1493, %v1588
      %v1606 = vmul.f32 %v1494, %v1590
      %v1607 = vpack.c.bf16 %v1592, %v1591
      %v1608 = vpack.c.bf16 %v1594, %v1593
      %v1609 = vpack.c.bf16 %v1596, %v1595
      %v1610 = vpack.c.bf16 %v1598, %v1597
      %v1611 = vpack.c.bf16 %v1600, %v1599
      %v1612 = vpack.c.bf16 %v1602, %v1601
      %v1613 = vpack.c.bf16 %v1604, %v1603
      %v1614 = vpack.c.bf16 %v1606, %v1605
      %v1616 = vshrl.u32 %v1607, 16
      %v1618 = vrot.slane %v1616, 7
      %v1619 = vshll.u32 %v1607, 16
      %v1621 = vor.u32 %v1618, %v1619
      %v1623 = vshrl.u32 %v1608, 16
      %v1625 = vrot.slane %v1623, 7
      %v1626 = vshll.u32 %v1608, 16
      %v1628 = vor.u32 %v1625, %v1626
      %v1630 = vshrl.u32 %v1609, 16
      %v1632 = vrot.slane %v1630, 7
      %v1633 = vshll.u32 %v1609, 16
      %v1635 = vor.u32 %v1632, %v1633
      %v1637 = vshrl.u32 %v1610, 16
      %v1639 = vrot.slane %v1637, 7
      %v1640 = vshll.u32 %v1610, 16
      %v1642 = vor.u32 %v1639, %v1640
      %v1644 = vshrl.u32 %v1611, 16
      %v1646 = vrot.slane %v1644, 7
      %v1647 = vshll.u32 %v1611, 16
      %v1649 = vor.u32 %v1646, %v1647
      %v1651 = vshrl.u32 %v1612, 16
      %v1653 = vrot.slane %v1651, 7
      %v1654 = vshll.u32 %v1612, 16
      %v1656 = vor.u32 %v1653, %v1654
      %v1658 = vshrl.u32 %v1613, 16
      %v1660 = vrot.slane %v1658, 7
      %v1661 = vshll.u32 %v1613, 16
      %v1663 = vor.u32 %v1660, %v1661
      %v1665 = vshrl.u32 %v1614, 16
      %v1667 = vrot.slane %v1665, 7
      %v1668 = vshll.u32 %v1614, 16
      %v1670 = vor.u32 %v1667, %v1668
      %vm1687 = vcmask 1040384
      %vm1688 = vsmask.f32 256
      %vm1689 = vmand %vm1687, %vm1688
      %v1690 = vsel %vm1689, 0, %v1621
      %v1691 = vsel %vm1689, 0, %v1628
      %v1692 = vsel %vm1689, 0, %v1635
      %v1693 = vsel %vm1689, 0, %v1642
      %v1694 = vsel %vm1689, 0, %v1649
      %v1695 = vsel %vm1689, 0, %v1656
      %v1696 = vsel %vm1689, 0, %v1663
      %v1697 = vsel %vm1689, 0, %v1670
      %v1698 = vsel %vm1689, %v1618, 0
      %v1699 = vsel %vm1689, %v1625, 0
      %v1700 = vsel %vm1689, %v1632, 0
      %v1701 = vsel %vm1689, %v1639, 0
      %v1702 = vsel %vm1689, %v1646, 0
      %v1703 = vsel %vm1689, %v1653, 0
      %v1704 = vsel %vm1689, %v1660, 0
      %v1705 = vsel %vm1689, %v1667, 0
      %v1722 = vunpack.c.l.b16 %v1690
      %v1723 = vunpack.c.h.b16 %v1690
      %v1724 = vunpack.c.l.b16 %v1698
      %v1725 = vunpack.c.l.b16 %v1691
      %v1726 = vunpack.c.h.b16 %v1691
      %v1727 = vunpack.c.l.b16 %v1699
      %v1728 = vunpack.c.l.b16 %v1692
      %v1729 = vunpack.c.h.b16 %v1692
      %v1730 = vunpack.c.l.b16 %v1700
      %v1731 = vunpack.c.l.b16 %v1693
      %v1732 = vunpack.c.h.b16 %v1693
      %v1733 = vunpack.c.l.b16 %v1701
      %v1734 = vunpack.c.l.b16 %v1694
      %v1735 = vunpack.c.h.b16 %v1694
      %v1736 = vunpack.c.l.b16 %v1702
      %v1737 = vunpack.c.l.b16 %v1695
      %v1738 = vunpack.c.h.b16 %v1695
      %v1739 = vunpack.c.l.b16 %v1703
      %v1740 = vunpack.c.l.b16 %v1696
      %v1741 = vunpack.c.h.b16 %v1696
      %v1742 = vunpack.c.l.b16 %v1704
      %v1743 = vunpack.c.l.b16 %v1697
      %v1744 = vunpack.c.h.b16 %v1697
      %v1745 = vunpack.c.l.b16 %v1705
      %v1746 = vpack.c.b16 %v1722, %v1722
      %v1747 = vpack.c.b16 %v1723, %v1723
      %v1748 = vpack.c.b16 %v1724, %v1724
      %v1749 = vpack.c.b16 %v1725, %v1725
      %v1750 = vpack.c.b16 %v1726, %v1726
      %v1751 = vpack.c.b16 %v1727, %v1727
      %v1752 = vpack.c.b16 %v1728, %v1728
      %v1753 = vpack.c.b16 %v1729, %v1729
      %v1754 = vpack.c.b16 %v1730, %v1730
      %v1755 = vpack.c.b16 %v1731, %v1731
      %v1756 = vpack.c.b16 %v1732, %v1732
      %v1757 = vpack.c.b16 %v1733, %v1733
      %v1758 = vpack.c.b16 %v1734, %v1734
      %v1759 = vpack.c.b16 %v1735, %v1735
      %v1760 = vpack.c.b16 %v1736, %v1736
      %v1761 = vpack.c.b16 %v1737, %v1737
      %v1762 = vpack.c.b16 %v1738, %v1738
      %v1763 = vpack.c.b16 %v1739, %v1739
      %v1764 = vpack.c.b16 %v1740, %v1740
      %v1765 = vpack.c.b16 %v1741, %v1741
      %v1766 = vpack.c.b16 %v1742, %v1742
      %v1767 = vpack.c.b16 %v1743, %v1743
      %v1768 = vpack.c.b16 %v1744, %v1744
      %v1769 = vpack.c.b16 %v1745, %v1745
      %vm1794 = vcmask 60416
      %1795 = vst.msk [vmem:[%s477] sm:$0xf] %vm1794, %v1746
      %1796 = vst.msk [vmem:[%s477 + $0x4] sm:$0xf] %vm1794, %v1747
      %vm1797 = vcmask 57344
      %1798 = vst.msk [vmem:[%s477 + $0x8] sm:$0x1] %vm1797, %v1748
      %1799 = vst.msk [vmem:[%s477 + $0xc] sm:$0xf] %vm1794, %v1749
      %1800 = vst.msk [vmem:[%s477 + $0x10] sm:$0xf] %vm1794, %v1750
      %1801 = vst.msk [vmem:[%s477 + $0x14] sm:$0x1] %vm1797, %v1751
      %1802 = vst.msk [vmem:[%s477 + $0x18] sm:$0xf] %vm1794, %v1752
      %1803 = vst.msk [vmem:[%s477 + $0x1c] sm:$0xf] %vm1794, %v1753
      %1804 = vst.msk [vmem:[%s477 + $0x20] sm:$0x1] %vm1797, %v1754
      %1805 = vst.msk [vmem:[%s477 + $0x24] sm:$0xf] %vm1794, %v1755
      %1806 = vst.msk [vmem:[%s477 + $0x28] sm:$0xf] %vm1794, %v1756
      %1807 = vst.msk [vmem:[%s477 + $0x2c] sm:$0x1] %vm1797, %v1757
      %1808 = vst.msk [vmem:[%s477 + $0x30] sm:$0xf] %vm1794, %v1758
      %1809 = vst.msk [vmem:[%s477 + $0x34] sm:$0xf] %vm1794, %v1759
      %1810 = vst.msk [vmem:[%s477 + $0x38] sm:$0x1] %vm1797, %v1760
      %1811 = vst.msk [vmem:[%s477 + $0x3c] sm:$0xf] %vm1794, %v1761
      %1812 = vst.msk [vmem:[%s477 + $0x40] sm:$0xf] %vm1794, %v1762
      %1813 = vst.msk [vmem:[%s477 + $0x44] sm:$0x1] %vm1797, %v1763
      %1814 = vst.msk [vmem:[%s477 + $0x48] sm:$0xf] %vm1794, %v1764
      %1815 = vst.msk [vmem:[%s477 + $0x4c] sm:$0xf] %vm1794, %v1765
      %1816 = vst.msk [vmem:[%s477 + $0x50] sm:$0x1] %vm1797, %v1766
      %1817 = vst.msk [vmem:[%s477 + $0x54] sm:$0xf] %vm1794, %v1767
      %1818 = vst.msk [vmem:[%s477 + $0x58] sm:$0xf] %vm1794, %v1768
      %1819 = vst.msk [vmem:[%s477 + $0x5c] sm:$0x1] %vm1797, %v1769
      %s1820 = smul.u32 8, %s23
      %p1821 = scmp.lt.s32.totalorder %s22, 1
      %s1822 = scalar_select %p1821, %s22, 1
      %p1823 = scmp.lt.s32.totalorder %s1820, 15
      %s1824 = scalar_select %p1823, %s1820, 15
      %s1825 = smul.addr %s1824, 3
      %s1826 = smul.addr %s1822, 48
      %s1827 = sadd.s32 %s1825, %s1826
      %s1828 = smul.addr %s1827, 4
      %s1829 = scalar_lea.vmem %s7, %s1828
      // Predicated region
      $region49: #{tpu_custom_call.1} parent=47 // pred_check
        %p1830 = pneg %p238
      $region50: #{tpu_custom_call.1} parent=47 // pred_check_branch
        %1832 = sbr.rel (%p1830) target = $region52
      $region51: #{tpu_custom_call.1} parent=47 // pred_region
        %s1833 = smul.u32 8, %s23
      $region52: #{tpu_custom_call.1} parent=47 // pred_fallthru
        _
    $region48: #{tpu_custom_call.1} parent=5 // pred_fallthru
      _
    %p1834 = scmp.le.s32.totalorder 2, %s13
    // Predicated region
    $region53: #{tpu_custom_call.1} parent=5 // pred_check
      %p1835 = pneg %p1834
    $region54: #{tpu_custom_call.1} parent=5 // pred_check_branch
      %1837 = sbr.rel (%p1835) target = $region56
    $region55: #{tpu_custom_call.1} parent=5 // pred_region
      %s1838 = ssub.s32 %s13, 2
      // Predicated region
      $region57: #{tpu_custom_call.1} parent=55 // pred_check
        %p1839 = pneg %p244
      $region58: #{tpu_custom_call.1} parent=55 // pred_check_branch
        %1841 = sbr.rel (%p1839) target = $region60
      $region59: #{tpu_custom_call.1} parent=55 // pred_region
        %s1842 = smul.u32 8, %s25
        %p1843 = scmp.lt.s32.totalorder %s24, 1
        %s1844 = scalar_select %p1843, %s24, 1
        %p1845 = scmp.lt.s32.totalorder %s1842, 15
        %s1846 = scalar_select %p1845, %s1842, 15
        %s1847 = smul.addr %s1846, 3
        %s1848 = smul.addr %s1844, 48
        %s1849 = sadd.s32 %s1847, %s1848
        %s1850 = smul.addr %s1849, 4
        %s1851 = scalar_lea.vmem %s7, %s1850
      $region60: #{tpu_custom_call.1} parent=55 // pred_fallthru
        _
    $region56: #{tpu_custom_call.1} parent=5 // pred_fallthru
      _
  $region6: #{tpu_custom_call.1} parent=0 // loop_footer
    %s17 = sadd.s32 1, %s13
  $region7: #{tpu_custom_call.1} parent=0 // loop_footer_branch
    %12 = sbr.rel target = $region3
  $region8: #{tpu_custom_call.1} parent=0 // loop_exit
    _

</llo_original>
